<compile_context>
chip_gen: v7x
topology: tpu7x:2x2x1
jax: 0.10.0
libtpu: 0.0.40
codegen_flags: <defaults>
</compile_context>

<pallas_src>
import functools

import jax
import jax.numpy as jnp
from jax.experimental import pallas as pl
from jax.experimental.pallas import tpu as pltpu

LN_EPS = 1e-6  # LayerNorm2d assumed: per-pixel LayerNorm over channels (ConvNeXt style)


def _pick_tile_p(L, cap=512):
    """Largest divisor of L that is <= cap and a multiple of 8, else L (full)."""
    for t in range(min(L, cap), 0, -1):
        if L % t == 0 and t % 8 == 0:
            return t
    return L


def _pick_ktile(K, T):
    """Superpixels per grid step: divisor of K, multiple of 8, Ktile*T lane-dense,
    and <= K//2 so the grid stays shardable across v7x's two TensorCores."""
    cap = max(1, K // 2)
    for t in range(cap, 0, -1):
        if K % t == 0 and t % 8 == 0 and (t * T) % 128 == 0:
            return t
    return K  # single block over all superpixels (block == full dim, always legal)


# ----------------------------------------------------------------------------
# Kernel 1: LayerNorm2d + fused q|k|v 1x1-conv projection (single MXU pass)
# ----------------------------------------------------------------------------
def ln_qkv_kernel(x_ref, g_ref, b_ref, w_ref, qkv_ref):
    x = x_ref[0].astype(jnp.float32)                        # (TP, C)
    mean = jnp.mean(x, axis=-1, keepdims=True)
    var = jnp.mean((x - mean) ** 2, axis=-1, keepdims=True)
    xn = (x - mean) * jax.lax.rsqrt(var + LN_EPS)
    xn = xn * g_ref[0] + b_ref[0]
    # Fused projection: one (TP, C) x (C, 2*qk_dim+dim) matmul on the MXU.
    qkv_ref[0] = jnp.dot(xn, w_ref[...],
                         preferred_element_type=jnp.float32).astype(qkv_ref.dtype)


def ln_qkv(x_nlc, gamma, beta, w_qkv, *, tile_p):
    B, L, C = x_nlc.shape
    dtot = w_qkv.shape[1]
    assert L % tile_p == 0  # TODO(synk): pad L to a tile multiple for arbitrary H*W
    return pl.pallas_call(
        ln_qkv_kernel,
        out_shape=jax.ShapeDtypeStruct((B, L, dtot), jnp.float32),
        grid_spec=pltpu.PrefetchScalarGridSpec(
            num_scalar_prefetch=0,
            grid=(B, L // tile_p),
            in_specs=[
                pl.BlockSpec((1, tile_p, C), lambda b, p: (b, p, 0)),
                pl.BlockSpec((1, C), lambda b, p: (0, 0)),
                pl.BlockSpec((1, C), lambda b, p: (0, 0)),
                pl.BlockSpec((C, dtot), lambda b, p: (0, 0)),
            ],
            out_specs=pl.BlockSpec((1, tile_p, dtot), lambda b, p: (b, p, 0))),
        compiler_params=pltpu.CompilerParams(
            dimension_semantics=("parallel", "parallel")),
    )(x_nlc, gamma, beta, w_qkv)


# ----------------------------------------------------------------------------
# Kernel 2: attention over top-k pixels for Ktile superpixels per grid step.
# Output is written directly in (B, dim, K*T) == 'b (h c) (k t)' layout.
# ----------------------------------------------------------------------------
def sp_attn_kernel(qkv_ref, s_ref, o_ref, *, num_heads, qk_dim, dim, scale, kweight):
    ktile, T = s_ref.shape[1], s_ref.shape[2]
    hd_qk = qk_dim // num_heads
    hd_v = dim // num_heads
    w = s_ref[0][:, :, None]                                 # (Ktile, T, 1)

    for h in range(num_heads):
        # Static channel slices of the fused qkv slab (channel layout is (h c)).
        qh = qkv_ref[0, :, :, h * hd_qk:(h + 1) * hd_qk] * scale     # scale folded into q
        kh = qkv_ref[0, :, :, qk_dim + h * hd_qk:qk_dim + (h + 1) * hd_qk]
        vh = qkv_ref[0, :, :, 2 * qk_dim + h * hd_v:2 * qk_dim + (h + 1) * hd_v]

        logits = jnp.einsum('ktc,ksc->kts', qh, kh,
                            preferred_element_type=jnp.float32)      # (Ktile, T, T)
        logits = logits - jnp.max(logits, axis=-1, keepdims=True)
        p = jnp.exp(logits)
        p = p * pl.reciprocal(jnp.sum(p, axis=-1, keepdims=True), approx=False)
        # NOTE: attn_drop has p=0.0 in the module defaults -> identity (not applied).

        vv = vh * w if kweight else vh                       # weight * v_sp_pixels
        oh = jnp.einsum('kts,ksc->ktc', p, vv,
                        preferred_element_type=jnp.float32) * w      # out = weight * out

        # 'k t c -> c (k t)': lane-dense store of (hd_v, Ktile*T); the small
        # transpose rides the otherwise-idle XLU slot.
        o_ref[0, h * hd_v:(h + 1) * hd_v, :] = (
            oh.reshape(ktile * T, hd_v).T.astype(o_ref.dtype))


def sp_attention(qkv_sp, sims, *, num_heads, qk_dim, dim, scale, kweight, ktile):
    B, K, T, dtot = qkv_sp.shape
    assert K % ktile == 0
    kern = functools.partial(sp_attn_kernel, num_heads=num_heads, qk_dim=qk_dim,
                             dim=dim, scale=scale, kweight=kweight)
    return pl.pallas_call(
        kern,
        out_shape=jax.ShapeDtypeStruct((B, dim, K * T), jnp.float32),
        grid_spec=pltpu.PrefetchScalarGridSpec(
            num_scalar_prefetch=0,
            grid=(B, K // ktile),
            in_specs=[
                pl.BlockSpec((1, ktile, T, dtot), lambda b, kb: (b, kb, 0, 0)),
                pl.BlockSpec((1, ktile, T), lambda b, kb: (b, kb, 0)),
            ],
            out_specs=pl.BlockSpec((1, dim, ktile * T), lambda b, kb: (b, 0, kb))),
        compiler_params=pltpu.CompilerParams(
            dimension_semantics=("parallel", "parallel")),
    )(qkv_sp, sims)


# ----------------------------------------------------------------------------
# Full forward (Pallas kernels + JAX index-plumbing glue)
# ----------------------------------------------------------------------------
def sp_intra_att_v2(x_nchw, affinity, num_spixels, params, *,
                    num_heads, qk_dim, topk, kweight=True, normz=False):
    assert normz is False  # TODO(synk): normz != False branches of weighted_scatter_mean not implemented
    B, C, H, W = x_nchw.shape
    L = H * W
    assert affinity.shape == (B, num_spixels, L)
    assert qk_dim % num_heads == 0 and C % num_heads == 0

    x_nlc = x_nchw.reshape(B, C, L).transpose(0, 2, 1)       # (B, L, C)

    # Fused projection weight [wq | wk | wv] -> single matmul / single qkv slab.
    w_qkv = jnp.concatenate([params['wq'], params['wk'], params['wv']], axis=1)
    tile_p = _pick_tile_p(L)
    qkv = ln_qkv(x_nlc, params['ln_g'], params['ln_b'], w_qkv, tile_p=tile_p)

    # top-k pixels per superpixel + ONE gather of the fused qkv rows (glue).
    # TODO(synk): this gather could move inside kernel 2 via scalar-prefetched
    #             indices + manual DMA to avoid materializing qkv_sp in HBM.
    sims, indices = jax.lax.top_k(affinity, topk)            # (B, K, T)
    K, T = num_spixels, topk
    dtot = 2 * qk_dim + C
    idx_flat = indices.reshape(B, K * T)
    qkv_sp = jax.vmap(lambda a, i: a[i])(qkv, idx_flat).reshape(B, K, T, dtot)

    ktile = _pick_ktile(K, T)
    scale = (qk_dim // num_heads) ** (-0.5)
    out_flat = sp_attention(qkv_sp, sims, num_heads=num_heads, qk_dim=qk_dim,
                            dim=C, scale=scale, kweight=kweight, ktile=ktile)  # (B, C, K*T)

    # weighted_scatter_mean with normz=False:  scatter_add(v, -1, indices, out)
    v_cl = qkv[:, :, 2 * qk_dim:].transpose(0, 2, 1)         # (B, C, L)
    out = jax.vmap(lambda base, idx, src: base.at[:, idx].add(src))(
        v_cl, idx_flat, out_flat)
    return out.reshape(B, C, H, W)


# ----------------------------------------------------------------------------
# Pure-JAX reference (same math, no Pallas, separate un-fused weights)
# ----------------------------------------------------------------------------
def _softmax(x):
    m = jnp.max(x, axis=-1, keepdims=True)
    e = jnp.exp(x - m)
    return e / jnp.sum(e, axis=-1, keepdims=True)


def reference_forward(x_nchw, affinity, params, *, num_heads, qk_dim, topk,
                      kweight=True):
    B, C, H, W = x_nchw.shape
    L = H * W
    x = x_nchw.reshape(B, C, L).transpose(0, 2, 1)
    mean = x.mean(-1, keepdims=True)
    var = ((x - mean) ** 2).mean(-1, keepdims=True)
    xn = (x - mean) / jnp.sqrt(var + LN_EPS) * params['ln_g'][0] + params['ln_b'][0]
    q = xn @ params['wq']
    k = xn @ params['wk']
    v = xn @ params['wv']

    sims, indices = jax.lax.top_k(affinity, topk)
    gather = jax.vmap(lambda a, i: a[i])
    hd_qk = qk_dim // num_heads
    hd_v = C // num_heads

    def heads(g, hd):
        Bq, K, T, _ = g.shape
        return g.reshape(Bq, K, T, num_heads, hd).transpose(0, 1, 3, 2, 4)

    q_sp = heads(gather(q, indices), hd_qk)
    k_sp = heads(gather(k, indices), hd_qk)
    v_sp = heads(gather(v, indices), hd_v)

    scale = hd_qk ** (-0.5)
    attn = jnp.einsum('bkhtc,bkhsc->bkhts', q_sp, k_sp) * scale
    attn = _softmax(attn)
    w = sims[:, :, None, :, None]
    vv = w * v_sp if kweight else v_sp
    out = jnp.einsum('bkhts,bkhsc->bkhtc', attn, vv) * w

    K = affinity.shape[1]
    out = out.transpose(0, 2, 4, 1, 3).reshape(B, C, K * topk)
    v_cl = v.transpose(0, 2, 1)
    idx_flat = indices.reshape(B, K * topk)
    res = jax.vmap(lambda base, idx, src: base.at[:, idx].add(src))(
        v_cl, idx_flat, out)
    return res.reshape(B, C, H, W)


if __name__ == "__main__":
    jax.config.update("jax_default_matmul_precision", "highest")

    # Module config (small, consistent with the forward):
    B, C, H, W = 2, 32, 16, 16          # dim = C = 32
    num_heads, qk_dim, topk = 2, 16, 16
    num_spixels = 16

    key = jax.random.PRNGKey(0)
    k1, k2, k3, k4, k5, k6, k7 = jax.random.split(key, 7)
    x = jax.random.normal(k1, (B, C, H, W), jnp.float32)
    affinity = jax.random.normal(k2, (B, num_spixels, H * W), jnp.float32)

    # Deterministic synthetic parameters (qkv_bias=False -> no conv biases).
    params = dict(
        ln_g=(1.0 + 0.1 * jax.random.normal(k3, (1, C))).astype(jnp.float32),
        ln_b=(0.1 * jax.random.normal(k4, (1, C))).astype(jnp.float32),
        wq=(0.2 * jax.random.normal(k5, (C, qk_dim))).astype(jnp.float32),
        wk=(0.2 * jax.random.normal(k6, (C, qk_dim))).astype(jnp.float32),
        wv=(0.2 * jax.random.normal(k7, (C, C))).astype(jnp.float32),
    )

    out = sp_intra_att_v2(x, affinity, num_spixels, params,
                          num_heads=num_heads, qk_dim=qk_dim, topk=topk)
    out = jax.block_until_ready(out)

    ref = reference_forward(x, affinity, params,
                            num_heads=num_heads, qk_dim=qk_dim, topk=topk)
    ref = jax.block_until_ready(ref)

    assert out.shape == (B, C, H, W)
    max_err = float(jnp.max(jnp.abs(out - ref)))
    assert max_err < 1e-3, f"mismatch vs reference: {max_err}"
    print("KERNEL_OK")
</pallas_src>

<mosaic_0001>
module attributes {stable_mosaic.version = 11 : i64} {
  func.func @ln_qkv_kernel(%arg0: i32, %arg1: i32, %arg2: memref<1x256x32xf32, #tpu.memory_space<vmem>>, %arg3: memref<1x32xf32, #tpu.memory_space<vmem>>, %arg4: memref<1x32xf32, #tpu.memory_space<vmem>>, %arg5: memref<32x64xf32, #tpu.memory_space<vmem>>, %arg6: memref<1x256x64xf32, #tpu.memory_space<vmem>>) attributes {dimension_semantics = [#tpu.dimension_semantics<parallel>, #tpu.dimension_semantics<parallel>], iteration_bounds = array<i64: 2, 1>, scalar_prefetch = 0 : i64, scratch_operands = 0 : i64, tpu.core_type = #tpu.core_type<tc>, window_params = [{transform_indices = @transform_0, window_bounds = array<i64: 1, 256, 32>}, {pipeline_mode = #tpu.pipeline_mode<synchronous>, transform_indices = @transform_1, window_bounds = array<i64: 1, 32>}, {pipeline_mode = #tpu.pipeline_mode<synchronous>, transform_indices = @transform_2, window_bounds = array<i64: 1, 32>}, {pipeline_mode = #tpu.pipeline_mode<synchronous>, transform_indices = @transform_3, window_bounds = array<i64: 32, 64>}, {transform_indices = @transform_4, window_bounds = array<i64: 1, 256, 64>}]} {
    %c0 = arith.constant 0 : index
    %c0_0 = arith.constant 0 : index
    %c0_1 = arith.constant 0 : index
    %0 = vector.load %arg2[%c0, %c0_0, %c0_1] : memref<1x256x32xf32, #tpu.memory_space<vmem>>, vector<1x256x32xf32>
    %1 = vector.shape_cast %0 : vector<1x256x32xf32> to vector<256x32xf32>
    %cst = arith.constant dense<0.000000e+00> : vector<256xf32>
    %2 = vector.multi_reduction <add>, %1, %cst [1] : vector<256x32xf32> to vector<256xf32>
    %3 = vector.shape_cast %2 : vector<256xf32> to vector<256x1xf32>
    %cst_2 = arith.constant 3.200000e+01 : f32
    %4 = vector.broadcast %cst_2 : f32 to vector<256x1xf32>
    %5 = arith.divf %3, %4 : vector<256x1xf32>
    %6 = vector.broadcast %5 : vector<256x1xf32> to vector<256x32xf32>
    %7 = arith.subf %1, %6 : vector<256x32xf32>
    %8 = arith.mulf %7, %7 : vector<256x32xf32>
    %cst_3 = arith.constant dense<0.000000e+00> : vector<256xf32>
    %9 = vector.multi_reduction <add>, %8, %cst_3 [1] : vector<256x32xf32> to vector<256xf32>
    %10 = vector.shape_cast %9 : vector<256xf32> to vector<256x1xf32>
    %cst_4 = arith.constant 3.200000e+01 : f32
    %11 = vector.broadcast %cst_4 : f32 to vector<256x1xf32>
    %12 = arith.divf %10, %11 : vector<256x1xf32>
    %13 = vector.broadcast %5 : vector<256x1xf32> to vector<256x32xf32>
    %14 = arith.subf %1, %13 : vector<256x32xf32>
    %cst_5 = arith.constant 9.99999997E-7 : f32
    %15 = vector.broadcast %cst_5 : f32 to vector<256x1xf32>
    %16 = arith.addf %12, %15 : vector<256x1xf32>
    %17 = math.rsqrt %16 : vector<256x1xf32>
    %18 = vector.broadcast %17 : vector<256x1xf32> to vector<256x32xf32>
    %19 = arith.mulf %14, %18 : vector<256x32xf32>
    %c0_6 = arith.constant 0 : index
    %c0_7 = arith.constant 0 : index
    %20 = vector.load %arg3[%c0_6, %c0_7] : memref<1x32xf32, #tpu.memory_space<vmem>>, vector<1x32xf32>
    %21 = vector.shape_cast %20 : vector<1x32xf32> to vector<32xf32>
    %22 = vector.shape_cast %21 : vector<32xf32> to vector<1x32xf32>
    %23 = vector.broadcast %22 : vector<1x32xf32> to vector<256x32xf32>
    %24 = arith.mulf %19, %23 : vector<256x32xf32>
    %c0_8 = arith.constant 0 : index
    %c0_9 = arith.constant 0 : index
    %25 = vector.load %arg4[%c0_8, %c0_9] : memref<1x32xf32, #tpu.memory_space<vmem>>, vector<1x32xf32>
    %26 = vector.shape_cast %25 : vector<1x32xf32> to vector<32xf32>
    %27 = vector.shape_cast %26 : vector<32xf32> to vector<1x32xf32>
    %28 = vector.broadcast %27 : vector<1x32xf32> to vector<256x32xf32>
    %29 = arith.addf %24, %28 : vector<256x32xf32>
    %c0_10 = arith.constant 0 : index
    %c0_11 = arith.constant 0 : index
    %30 = vector.load %arg5[%c0_10, %c0_11] : memref<32x64xf32, #tpu.memory_space<vmem>>, vector<32x64xf32>
    %cst_12 = arith.constant dense<0.000000e+00> : vector<256x64xf32>
    %31 = tpu.matmul %29, %30, %cst_12 {dimension_numbers = #tpu.dot_dimension_numbers<[1], [0], [0], [1], [0, 0, 1, 1], [], []>, precision = #tpu.contract_precision<fp32>} : vector<256x32xf32>, vector<32x64xf32>, vector<256x64xf32> -> vector<256x64xf32>
    %c0_13 = arith.constant 0 : index
    %c0_14 = arith.constant 0 : index
    %c0_15 = arith.constant 0 : index
    %32 = vector.load %arg6[%c0_13, %c0_14, %c0_15] : memref<1x256x64xf32, #tpu.memory_space<vmem>>, vector<1x256x64xf32>
    %33 = vector.shape_cast %32 : vector<1x256x64xf32> to vector<256x64xf32>
    %34 = vector.shape_cast %31 : vector<256x64xf32> to vector<1x256x64xf32>
    tpu.vector_store %arg6[%c0_13, %c0_14, %c0_15], %34 {strides = array<i32>} : memref<1x256x64xf32, #tpu.memory_space<vmem>>, vector<1x256x64xf32>,
    return
  }
  func.func @transform_0(%arg0: i32, %arg1: i32) -> (i32, i32, i32) {
    %c0_i32 = arith.constant 0 : i32
    %c0_i32_0 = arith.constant 0 : i32
    return %arg0, %arg1, %c0_i32 : i32, i32, i32
  }
  func.func @transform_1(%arg0: i32, %arg1: i32) -> (i32, i32) {
    %c0_i32 = arith.constant 0 : i32
    %c0_i32_0 = arith.constant 0 : i32
    %c0_i32_1 = arith.constant 0 : i32
    return %c0_i32, %c0_i32_0 : i32, i32
  }
  func.func @transform_2(%arg0: i32, %arg1: i32) -> (i32, i32) {
    %c0_i32 = arith.constant 0 : i32
    %c0_i32_0 = arith.constant 0 : i32
    %c0_i32_1 = arith.constant 0 : i32
    return %c0_i32, %c0_i32_0 : i32, i32
  }
  func.func @transform_3(%arg0: i32, %arg1: i32) -> (i32, i32) {
    %c0_i32 = arith.constant 0 : i32
    %c0_i32_0 = arith.constant 0 : i32
    %c0_i32_1 = arith.constant 0 : i32
    return %c0_i32, %c0_i32_0 : i32, i32
  }
  func.func @transform_4(%arg0: i32, %arg1: i32) -> (i32, i32, i32) {
    %c0_i32 = arith.constant 0 : i32
    %c0_i32_0 = arith.constant 0 : i32
    return %arg0, %arg1, %c0_i32 : i32, i32, i32
  }
}

</mosaic_0001>

<llo_original>
// kernel: tpu_custom_call.1
$region0: #{tpu_custom_call.1}
  #allocation0 [shape = 'u32[]', space=smem, size = 0x4, offset = 0x4, fixed_abs, tag = 'smem constant byte address 0x4 - core index']
  #allocation1 [shape = 'u32[144,128]{1,0:T(1,128)}', space=vmem, size = 0x12000, scoped, tag = 'internal scratch']
  %s0 = inlined_call_operand.vmem [shape: f32[2,256,32], index: 0, kind: input, shape index: {}]
  %s1 = inlined_call_operand.vmem [shape: f32[1,32], index: 1, kind: input, shape index: {}]
  %s2 = inlined_call_operand.vmem [shape: f32[1,32], index: 2, kind: input, shape index: {}]
  %s3 = inlined_call_operand.vmem [shape: f32[32,64], index: 3, kind: input, shape index: {}]
  %s4 = inlined_call_operand.vmem [shape: f32[2,256,64], index: 4, kind: output, shape index: {}]
  %s5 = sld [smem:[#allocation0]]
  $region49: #{tpu_custom_call.1} parent=0
    _
  %s7 = ssub.s32 1, %s5
  %s8 = scalar_select 0, %s7, %s5
  loop: start=0, step=1, limit=4
  $region2: #{tpu_custom_call.1} parent=0 // loop_pre_header
    _
  $region3: #{tpu_custom_call.1} parent=0 // loop_header
    %s10 = sphi 0, %s14
    %p11 = scmp.ge.s32.totalorder %s10, 4
    %s17 = sphi 0, %s29
    %s18 = sphi 0, %s25
    %s19 = sphi 0, %s17
    %s20 = sphi 0, %s18
    %s21 = sphi 0, %s19
    %s22 = sphi 0, %s20
    %s34 = sphi 0, %s36
    %s37 = sphi 0, %s34
    %s38 = sphi 0, %s37
    %s54 = sphi 0, %s38
    %s58 = sphi 0, %s58
    %s60 = sphi 0, %s58
    %s61 = sphi 0, %s60
    %s75 = sphi 0, %s61
    %s79 = sphi 0, %s79
    %s81 = sphi 0, %s79
    %s82 = sphi 0, %s81
    %s96 = sphi 0, %s82
    %s100 = sphi 0, %s100
    %s102 = sphi 0, %s100
    %s103 = sphi 0, %s102
    %s117 = sphi 0, %s103
    %s125 = sphi 0, %s127
    %s128 = sphi 0, %s125
    %s129 = sphi 0, %s128
    %s145 = sphi 0, %s129
  $region4: #{tpu_custom_call.1} parent=0 // loop_header_branch
    %13 = sbr.rel (%p11) target = $region8
  $region5: #{tpu_custom_call.1} parent=0 // loop_body
    %s15 = ssub.s32 %s10, 1
    %s16 = ssub.s32 %s10, 2
    %s23 = sadd.s32 1, %s18
    %p24 = scmp.ge.s32.totalorder %s23, 1
    %s25 = scalar_select %p24, 0, %s23
    %s26 = sadd.s32 1, %s17
    %s27 = scalar_select %p24, %s26, %s17
    %p28 = scmp.ge.s32.totalorder %s27, 2
    %s29 = scalar_select %p28, 0, %s27
    %s30 = ssub.s32 %s17, %s29
    %s31 = ssub.s32 %s18, %s25
    %s32 = sor.u32 %s30, %s31
    %p33 = scmp.eq.s32.totalorder %s32, 0
    %s35 = sadd.s32 %s34, 1
    %s36 = scalar_select %p33, %s34, %s35
    %p39 = pneg %p33
    %p40 = scmp.eq.s32.totalorder %s10, 1
    %p41 = por %p39, %p40
    %p42 = scmp.ne.s32.totalorder %s34, %s37
    %p43 = scmp.eq.s32.totalorder %s10, 0
    %p44 = por %p42, %p43
    %p45 = scmp.ne.s32.totalorder %s34, %s37
    %p46 = scmp.eq.s32.totalorder %s15, 1
    %p47 = por %p45, %p46
    %p48 = scmp.ne.s32.totalorder %s37, %s38
    %p49 = scmp.eq.s32.totalorder %s15, 0
    %p50 = por %p48, %p49
    %p51 = scmp.ne.s32.totalorder %s37, %s38
    %p52 = scmp.eq.s32.totalorder %s16, 1
    %p53 = por %p51, %p52
    %p55 = scmp.ne.s32.totalorder %s38, %s54
    %p56 = scmp.eq.s32.totalorder %s16, 0
    %p57 = por %p55, %p56
    %s59 = sadd.s32 %s58, 1
    %p62 = scmp.eq.s32.totalorder %s10, 1
    %p63 = scmp.ne.s32.totalorder %s58, %s60
    %p64 = scmp.eq.s32.totalorder %s10, 0
    %p65 = por %p63, %p64
    %p66 = scmp.ne.s32.totalorder %s58, %s60
    %p67 = scmp.eq.s32.totalorder %s15, 1
    %p68 = por %p66, %p67
    %p69 = scmp.ne.s32.totalorder %s60, %s61
    %p70 = scmp.eq.s32.totalorder %s15, 0
    %p71 = por %p69, %p70
    %p72 = scmp.ne.s32.totalorder %s60, %s61
    %p73 = scmp.eq.s32.totalorder %s16, 1
    %p74 = por %p72, %p73
    %p76 = scmp.ne.s32.totalorder %s61, %s75
    %p77 = scmp.eq.s32.totalorder %s16, 0
    %p78 = por %p76, %p77
    %s80 = sadd.s32 %s79, 1
    %p83 = scmp.eq.s32.totalorder %s10, 1
    %p84 = scmp.ne.s32.totalorder %s79, %s81
    %p85 = scmp.eq.s32.totalorder %s10, 0
    %p86 = por %p84, %p85
    %p87 = scmp.ne.s32.totalorder %s79, %s81
    %p88 = scmp.eq.s32.totalorder %s15, 1
    %p89 = por %p87, %p88
    %p90 = scmp.ne.s32.totalorder %s81, %s82
    %p91 = scmp.eq.s32.totalorder %s15, 0
    %p92 = por %p90, %p91
    %p93 = scmp.ne.s32.totalorder %s81, %s82
    %p94 = scmp.eq.s32.totalorder %s16, 1
    %p95 = por %p93, %p94
    %p97 = scmp.ne.s32.totalorder %s82, %s96
    %p98 = scmp.eq.s32.totalorder %s16, 0
    %p99 = por %p97, %p98
    %s101 = sadd.s32 %s100, 1
    %p104 = scmp.eq.s32.totalorder %s10, 1
    %p105 = scmp.ne.s32.totalorder %s100, %s102
    %p106 = scmp.eq.s32.totalorder %s10, 0
    %p107 = por %p105, %p106
    %p108 = scmp.ne.s32.totalorder %s100, %s102
    %p109 = scmp.eq.s32.totalorder %s15, 1
    %p110 = por %p108, %p109
    %p111 = scmp.ne.s32.totalorder %s102, %s103
    %p112 = scmp.eq.s32.totalorder %s15, 0
    %p113 = por %p111, %p112
    %p114 = scmp.ne.s32.totalorder %s102, %s103
    %p115 = scmp.eq.s32.totalorder %s16, 1
    %p116 = por %p114, %p115
    %p118 = scmp.ne.s32.totalorder %s103, %s117
    %p119 = scmp.eq.s32.totalorder %s16, 0
    %p120 = por %p118, %p119
    %s121 = ssub.s32 %s17, %s29
    %s122 = ssub.s32 %s18, %s25
    %s123 = sor.u32 %s121, %s122
    %p124 = scmp.eq.s32.totalorder %s123, 0
    %s126 = sadd.s32 %s125, 1
    %s127 = scalar_select %p124, %s125, %s126
    %p130 = pneg %p124
    %p131 = scmp.eq.s32.totalorder %s10, 1
    %p132 = por %p130, %p131
    %p133 = scmp.ne.s32.totalorder %s125, %s128
    %p134 = scmp.eq.s32.totalorder %s10, 0
    %p135 = por %p133, %p134
    %p136 = scmp.ne.s32.totalorder %s125, %s128
    %p137 = scmp.eq.s32.totalorder %s15, 1
    %p138 = por %p136, %p137
    %p139 = scmp.ne.s32.totalorder %s128, %s129
    %p140 = scmp.eq.s32.totalorder %s15, 0
    %p141 = por %p139, %p140
    %p142 = scmp.ne.s32.totalorder %s128, %s129
    %p143 = scmp.eq.s32.totalorder %s16, 1
    %p144 = por %p142, %p143
    %p146 = scmp.ne.s32.totalorder %s129, %s145
    %p147 = scmp.eq.s32.totalorder %s16, 0
    %p148 = por %p146, %p147
    %p149 = scmp.le.s32.totalorder 1, %s10
    %p150 = scmp.lt.s32.totalorder %s10, 3
    %p151 = pnand %p149, %p150
    %p152 = pneg %p151
    // Predicated region
    $region9: #{tpu_custom_call.1} parent=5 // pred_check
      _
    $region10: #{tpu_custom_call.1} parent=5 // pred_check_branch
      %154 = sbr.rel (%p151) target = $region12
    $region11: #{tpu_custom_call.1} parent=5 // pred_region
      %s155 = ssub.s32 %s10, 1
      // Predicated region
      $region13: #{tpu_custom_call.1} parent=11 // pred_check
        %p156 = pneg %p71
      $region14: #{tpu_custom_call.1} parent=11 // pred_check_branch
        %158 = sbr.rel (%p156) target = $region16
      $region15: #{tpu_custom_call.1} parent=11 // pred_region
        _
      $region16: #{tpu_custom_call.1} parent=11 // pred_fallthru
        _
      // Predicated region
      $region17: #{tpu_custom_call.1} parent=11 // pred_check
        %p159 = pneg %p92
      $region18: #{tpu_custom_call.1} parent=11 // pred_check_branch
        %161 = sbr.rel (%p159) target = $region20
      $region19: #{tpu_custom_call.1} parent=11 // pred_region
        _
      $region20: #{tpu_custom_call.1} parent=11 // pred_fallthru
        _
      // Predicated region
      $region21: #{tpu_custom_call.1} parent=11 // pred_check
        %p162 = pneg %p113
      $region22: #{tpu_custom_call.1} parent=11 // pred_check_branch
        %164 = sbr.rel (%p162) target = $region24
      $region23: #{tpu_custom_call.1} parent=11 // pred_region
        _
      $region24: #{tpu_custom_call.1} parent=11 // pred_fallthru
        _
    $region12: #{tpu_custom_call.1} parent=5 // pred_fallthru
      _
    %p165 = scmp.lt.s32.totalorder %s10, 2
    // Predicated region
    $region25: #{tpu_custom_call.1} parent=5 // pred_check
      %p166 = pneg %p165
    $region26: #{tpu_custom_call.1} parent=5 // pred_check_branch
      %168 = sbr.rel (%p166) target = $region28
    $region27: #{tpu_custom_call.1} parent=5 // pred_region
      // Predicated region
      $region29: #{tpu_custom_call.1} parent=27 // pred_check
        %p169 = pneg %p44
      $region30: #{tpu_custom_call.1} parent=27 // pred_check_branch
        %171 = sbr.rel (%p169) target = $region32
      $region31: #{tpu_custom_call.1} parent=27 // pred_region
        %s172 = smul.u32 32, %s18
        %p173 = scmp.lt.s32.totalorder %s17, 1
        %s174 = scalar_select %p173, %s17, 1
        %p175 = scmp.lt.s32.totalorder %s172, 31
        %s176 = scalar_select %p175, %s172, 31
        %s177 = smul.addr %s174, 32
        %s178 = sadd.s32 %s176, %s177
        %s179 = smul.addr %s178, 8
        %s180 = scalar_lea.vmem %s0, %s179
        %s181 = smul.u32 32, %s18
      $region32: #{tpu_custom_call.1} parent=27 // pred_fallthru
        _
    $region28: #{tpu_custom_call.1} parent=5 // pred_fallthru
      _
    %p182 = scmp.le.s32.totalorder 1, %s10
    %p183 = scmp.lt.s32.totalorder %s10, 3
    %p184 = pnand %p182, %p183
    %p185 = pneg %p184
    // Predicated region
    $region33: #{tpu_custom_call.1} parent=5 // pred_check
      _
    $region34: #{tpu_custom_call.1} parent=5 // pred_check_branch
      %187 = sbr.rel (%p184) target = $region36
    $region35: #{tpu_custom_call.1} parent=5 // pred_region
      %s188 = ssub.s32 %s10, 1
      %s189 = smul.u32 32, %s20
      %p190 = scmp.lt.s32.totalorder %s19, 1
      %s191 = scalar_select %p190, %s19, 1
      %p192 = scmp.lt.s32.totalorder %s189, 31
      %s193 = scalar_select %p192, %s189, 31
      %s194 = smul.addr %s191, 32
      %s195 = sadd.s32 %s193, %s194
      %s196 = smul.addr %s195, 8
      %s197 = scalar_lea.vmem %s0, %s196
      %p198 = pneg %p50
      %p199 = pneg %p47
      %p200 = pneg %p71
      %p201 = pneg %p68
      %p202 = pneg %p92
      %p203 = pneg %p89
      %p204 = pneg %p113
      %p205 = pneg %p110
      %p206 = pneg %p141
      %p207 = pneg %p138
      %s208 = smul.u32 32, %s20
      %p209 = scmp.lt.s32.totalorder %s19, 1
      %s210 = scalar_select %p209, %s19, 1
      %p211 = scmp.lt.s32.totalorder %s208, 31
      %s212 = scalar_select %p211, %s208, 31
      %s213 = smul.addr %s210, 32
      %s214 = sadd.s32 %s212, %s213
      %s215 = smul.addr %s214, 8
      %s216 = scalar_lea.vmem %s4, %s215
      %s217 = smul.u32 32, %s20
      %p218 = scmp.lt.s32.totalorder %s19, 1
      %s219 = scalar_select %p218, %s19, 1
      %p220 = scmp.lt.s32.totalorder %s217, 31
      %s221 = scalar_select %p220, %s217, 31
      %s222 = smul.addr %s219, 32
      %s223 = sadd.s32 %s221, %s222
      %s224 = smul.addr %s223, 8
      %s225 = scalar_lea.vmem %s0, %s224
      %s226 = smul.u32 32, %s20
      %s227 = smul.u32 32, %s20
      %p228 = scmp.lt.s32.totalorder %s19, 1
      %s229 = scalar_select %p228, %s19, 1
      %p230 = scmp.lt.s32.totalorder %s227, 31
      %s231 = scalar_select %p230, %s227, 31
      %s232 = smul.addr %s229, 32
      %s233 = sadd.s32 %s231, %s232
      %s234 = smul.addr %s233, 8
      %s235 = scalar_lea.vmem %s4, %s234
      %s236 = smul.u32 32, %s20
      %v237 = vld [vmem:[%s225] sm:$0xff]
      %v238 = vld [vmem:[%s225 + $0x8] sm:$0xff]
      %v239 = vld [vmem:[%s225 + $0x10] sm:$0xff]
      %v240 = vld [vmem:[%s225 + $0x18] sm:$0xff]
      %v241 = vld [vmem:[%s225 + $0x20] sm:$0xff]
      %v242 = vld [vmem:[%s225 + $0x28] sm:$0xff]
      %v243 = vld [vmem:[%s225 + $0x30] sm:$0xff]
      %v244 = vld [vmem:[%s225 + $0x38] sm:$0xff]
      %v245 = vld [vmem:[%s225 + $0x40] sm:$0xff]
      %v246 = vld [vmem:[%s225 + $0x48] sm:$0xff]
      %v247 = vld [vmem:[%s225 + $0x50] sm:$0xff]
      %v248 = vld [vmem:[%s225 + $0x58] sm:$0xff]
      %v249 = vld [vmem:[%s225 + $0x60] sm:$0xff]
      %v250 = vld [vmem:[%s225 + $0x68] sm:$0xff]
      %v251 = vld [vmem:[%s225 + $0x70] sm:$0xff]
      %v252 = vld [vmem:[%s225 + $0x78] sm:$0xff]
      %v253 = vld [vmem:[%s225 + $0x80] sm:$0xff]
      %v254 = vld [vmem:[%s225 + $0x88] sm:$0xff]
      %v255 = vld [vmem:[%s225 + $0x90] sm:$0xff]
      %v256 = vld [vmem:[%s225 + $0x98] sm:$0xff]
      %v257 = vld [vmem:[%s225 + $0xa0] sm:$0xff]
      %v258 = vld [vmem:[%s225 + $0xa8] sm:$0xff]
      %v259 = vld [vmem:[%s225 + $0xb0] sm:$0xff]
      %v260 = vld [vmem:[%s225 + $0xb8] sm:$0xff]
      %v261 = vld [vmem:[%s225 + $0xc0] sm:$0xff]
      %v262 = vld [vmem:[%s225 + $0xc8] sm:$0xff]
      %v263 = vld [vmem:[%s225 + $0xd0] sm:$0xff]
      %v264 = vld [vmem:[%s225 + $0xd8] sm:$0xff]
      %v265 = vld [vmem:[%s225 + $0xe0] sm:$0xff]
      %v266 = vld [vmem:[%s225 + $0xe8] sm:$0xff]
      %v267 = vld [vmem:[%s225 + $0xf0] sm:$0xff]
      %v268 = vld [vmem:[%s225 + $0xf8] sm:$0xff]
      %vm269 = vcmask 261120
      %v270 = vsel %vm269, %v237, 0.0
      %271 = vadd.xlane.f32.xlu0 %v270
      %v272 = vpop.xlane.xlu0 %271
      %v273 = vsel %vm269, %v238, 0.0
      %274 = vadd.xlane.f32.xlu0 %v273
      %v275 = vpop.xlane.xlu0 %274
      %v276 = vsel %vm269, %v239, 0.0
      %277 = vadd.xlane.f32.xlu0 %v276
      %v278 = vpop.xlane.xlu0 %277
      %v279 = vsel %vm269, %v240, 0.0
      %280 = vadd.xlane.f32.xlu0 %v279
      %v281 = vpop.xlane.xlu0 %280
      %v282 = vsel %vm269, %v241, 0.0
      %283 = vadd.xlane.f32.xlu0 %v282
      %v284 = vpop.xlane.xlu0 %283
      %v285 = vsel %vm269, %v242, 0.0
      %286 = vadd.xlane.f32.xlu0 %v285
      %v287 = vpop.xlane.xlu0 %286
      %v288 = vsel %vm269, %v243, 0.0
      %289 = vadd.xlane.f32.xlu0 %v288
      %v290 = vpop.xlane.xlu0 %289
      %v291 = vsel %vm269, %v244, 0.0
      %292 = vadd.xlane.f32.xlu0 %v291
      %v293 = vpop.xlane.xlu0 %292
      %v294 = vsel %vm269, %v245, 0.0
      %295 = vadd.xlane.f32.xlu0 %v294
      %v296 = vpop.xlane.xlu0 %295
      %v297 = vsel %vm269, %v246, 0.0
      %298 = vadd.xlane.f32.xlu0 %v297
      %v299 = vpop.xlane.xlu0 %298
      %v300 = vsel %vm269, %v247, 0.0
      %301 = vadd.xlane.f32.xlu0 %v300
      %v302 = vpop.xlane.xlu0 %301
      %v303 = vsel %vm269, %v248, 0.0
      %304 = vadd.xlane.f32.xlu0 %v303
      %v305 = vpop.xlane.xlu0 %304
      %v306 = vsel %vm269, %v249, 0.0
      %307 = vadd.xlane.f32.xlu0 %v306
      %v308 = vpop.xlane.xlu0 %307
      %v309 = vsel %vm269, %v250, 0.0
      %310 = vadd.xlane.f32.xlu0 %v309
      %v311 = vpop.xlane.xlu0 %310
      %v312 = vsel %vm269, %v251, 0.0
      %313 = vadd.xlane.f32.xlu0 %v312
      %v314 = vpop.xlane.xlu0 %313
      %v315 = vsel %vm269, %v252, 0.0
      %316 = vadd.xlane.f32.xlu0 %v315
      %v317 = vpop.xlane.xlu0 %316
      %v318 = vsel %vm269, %v253, 0.0
      %319 = vadd.xlane.f32.xlu0 %v318
      %v320 = vpop.xlane.xlu0 %319
      %v321 = vsel %vm269, %v254, 0.0
      %322 = vadd.xlane.f32.xlu0 %v321
      %v323 = vpop.xlane.xlu0 %322
      %v324 = vsel %vm269, %v255, 0.0
      %325 = vadd.xlane.f32.xlu0 %v324
      %v326 = vpop.xlane.xlu0 %325
      %v327 = vsel %vm269, %v256, 0.0
      %328 = vadd.xlane.f32.xlu0 %v327
      %v329 = vpop.xlane.xlu0 %328
      %v330 = vsel %vm269, %v257, 0.0
      %331 = vadd.xlane.f32.xlu0 %v330
      %v332 = vpop.xlane.xlu0 %331
      %v333 = vsel %vm269, %v258, 0.0
      %334 = vadd.xlane.f32.xlu0 %v333
      %v335 = vpop.xlane.xlu0 %334
      %v336 = vsel %vm269, %v259, 0.0
      %337 = vadd.xlane.f32.xlu0 %v336
      %v338 = vpop.xlane.xlu0 %337
      %v339 = vsel %vm269, %v260, 0.0
      %340 = vadd.xlane.f32.xlu0 %v339
      %v341 = vpop.xlane.xlu0 %340
      %v342 = vsel %vm269, %v261, 0.0
      %343 = vadd.xlane.f32.xlu0 %v342
      %v344 = vpop.xlane.xlu0 %343
      %v345 = vsel %vm269, %v262, 0.0
      %346 = vadd.xlane.f32.xlu0 %v345
      %v347 = vpop.xlane.xlu0 %346
      %v348 = vsel %vm269, %v263, 0.0
      %349 = vadd.xlane.f32.xlu0 %v348
      %v350 = vpop.xlane.xlu0 %349
      %v351 = vsel %vm269, %v264, 0.0
      %352 = vadd.xlane.f32.xlu0 %v351
      %v353 = vpop.xlane.xlu0 %352
      %v354 = vsel %vm269, %v265, 0.0
      %355 = vadd.xlane.f32.xlu0 %v354
      %v356 = vpop.xlane.xlu0 %355
      %v357 = vsel %vm269, %v266, 0.0
      %358 = vadd.xlane.f32.xlu0 %v357
      %v359 = vpop.xlane.xlu0 %358
      %v360 = vsel %vm269, %v267, 0.0
      %361 = vadd.xlane.f32.xlu0 %v360
      %v362 = vpop.xlane.xlu0 %361
      %v363 = vsel %vm269, %v268, 0.0
      %364 = vadd.xlane.f32.xlu0 %v363
      %v365 = vpop.xlane.xlu0 %364
      %v366 = vrcp.pop 32.0
      %v367 = vmul.f32 %v272, %v366
      %v368 = vmul.f32 %v275, %v366
      %v369 = vmul.f32 %v278, %v366
      %v370 = vmul.f32 %v281, %v366
      %v371 = vmul.f32 %v284, %v366
      %v372 = vmul.f32 %v287, %v366
      %v373 = vmul.f32 %v290, %v366
      %v374 = vmul.f32 %v293, %v366
      %v375 = vmul.f32 %v296, %v366
      %v376 = vmul.f32 %v299, %v366
      %v377 = vmul.f32 %v302, %v366
      %v378 = vmul.f32 %v305, %v366
      %v379 = vmul.f32 %v308, %v366
      %v380 = vmul.f32 %v311, %v366
      %v381 = vmul.f32 %v314, %v366
      %v382 = vmul.f32 %v317, %v366
      %v383 = vmul.f32 %v320, %v366
      %v384 = vmul.f32 %v323, %v366
      %v385 = vmul.f32 %v326, %v366
      %v386 = vmul.f32 %v329, %v366
      %v387 = vmul.f32 %v332, %v366
      %v388 = vmul.f32 %v335, %v366
      %v389 = vmul.f32 %v338, %v366
      %v390 = vmul.f32 %v341, %v366
      %v391 = vmul.f32 %v344, %v366
      %v392 = vmul.f32 %v347, %v366
      %v393 = vmul.f32 %v350, %v366
      %v394 = vmul.f32 %v353, %v366
      %v395 = vmul.f32 %v356, %v366
      %v396 = vmul.f32 %v359, %v366
      %v397 = vmul.f32 %v362, %v366
      %v398 = vmul.f32 %v365, %v366
      %v399 = vsub.f32 %v237, %v367
      %v400 = vsub.f32 %v238, %v368
      %v401 = vsub.f32 %v239, %v369
      %v402 = vsub.f32 %v240, %v370
      %v403 = vsub.f32 %v241, %v371
      %v404 = vsub.f32 %v242, %v372
      %v405 = vsub.f32 %v243, %v373
      %v406 = vsub.f32 %v244, %v374
      %v407 = vsub.f32 %v245, %v375
      %v408 = vsub.f32 %v246, %v376
      %v409 = vsub.f32 %v247, %v377
      %v410 = vsub.f32 %v248, %v378
      %v411 = vsub.f32 %v249, %v379
      %v412 = vsub.f32 %v250, %v380
      %v413 = vsub.f32 %v251, %v381
      %v414 = vsub.f32 %v252, %v382
      %v415 = vsub.f32 %v253, %v383
      %v416 = vsub.f32 %v254, %v384
      %v417 = vsub.f32 %v255, %v385
      %v418 = vsub.f32 %v256, %v386
      %v419 = vsub.f32 %v257, %v387
      %v420 = vsub.f32 %v258, %v388
      %v421 = vsub.f32 %v259, %v389
      %v422 = vsub.f32 %v260, %v390
      %v423 = vsub.f32 %v261, %v391
      %v424 = vsub.f32 %v262, %v392
      %v425 = vsub.f32 %v263, %v393
      %v426 = vsub.f32 %v264, %v394
      %v427 = vsub.f32 %v265, %v395
      %v428 = vsub.f32 %v266, %v396
      %v429 = vsub.f32 %v267, %v397
      %v430 = vsub.f32 %v268, %v398
      %v431 = vmul.f32 %v399, %v399
      %v432 = vmul.f32 %v400, %v400
      %v433 = vmul.f32 %v401, %v401
      %v434 = vmul.f32 %v402, %v402
      %v435 = vmul.f32 %v403, %v403
      %v436 = vmul.f32 %v404, %v404
      %v437 = vmul.f32 %v405, %v405
      %v438 = vmul.f32 %v406, %v406
      %v439 = vmul.f32 %v407, %v407
      %v440 = vmul.f32 %v408, %v408
      %v441 = vmul.f32 %v409, %v409
      %v442 = vmul.f32 %v410, %v410
      %v443 = vmul.f32 %v411, %v411
      %v444 = vmul.f32 %v412, %v412
      %v445 = vmul.f32 %v413, %v413
      %v446 = vmul.f32 %v414, %v414
      %v447 = vmul.f32 %v415, %v415
      %v448 = vmul.f32 %v416, %v416
      %v449 = vmul.f32 %v417, %v417
      %v450 = vmul.f32 %v418, %v418
      %v451 = vmul.f32 %v419, %v419
      %v452 = vmul.f32 %v420, %v420
      %v453 = vmul.f32 %v421, %v421
      %v454 = vmul.f32 %v422, %v422
      %v455 = vmul.f32 %v423, %v423
      %v456 = vmul.f32 %v424, %v424
      %v457 = vmul.f32 %v425, %v425
      %v458 = vmul.f32 %v426, %v426
      %v459 = vmul.f32 %v427, %v427
      %v460 = vmul.f32 %v428, %v428
      %v461 = vmul.f32 %v429, %v429
      %v462 = vmul.f32 %v430, %v430
      %v463 = vsel %vm269, %v431, 0.0
      %464 = vadd.xlane.f32.xlu0 %v463
      %v465 = vpop.xlane.xlu0 %464
      %v466 = vsel %vm269, %v432, 0.0
      %467 = vadd.xlane.f32.xlu0 %v466
      %v468 = vpop.xlane.xlu0 %467
      %v469 = vsel %vm269, %v433, 0.0
      %470 = vadd.xlane.f32.xlu0 %v469
      %v471 = vpop.xlane.xlu0 %470
      %v472 = vsel %vm269, %v434, 0.0
      %473 = vadd.xlane.f32.xlu0 %v472
      %v474 = vpop.xlane.xlu0 %473
      %v475 = vsel %vm269, %v435, 0.0
      %476 = vadd.xlane.f32.xlu0 %v475
      %v477 = vpop.xlane.xlu0 %476
      %v478 = vsel %vm269, %v436, 0.0
      %479 = vadd.xlane.f32.xlu0 %v478
      %v480 = vpop.xlane.xlu0 %479
      %v481 = vsel %vm269, %v437, 0.0
      %482 = vadd.xlane.f32.xlu0 %v481
      %v483 = vpop.xlane.xlu0 %482
      %v484 = vsel %vm269, %v438, 0.0
      %485 = vadd.xlane.f32.xlu0 %v484
      %v486 = vpop.xlane.xlu0 %485
      %v487 = vsel %vm269, %v439, 0.0
      %488 = vadd.xlane.f32.xlu0 %v487
      %v489 = vpop.xlane.xlu0 %488
      %v490 = vsel %vm269, %v440, 0.0
      %491 = vadd.xlane.f32.xlu0 %v490
      %v492 = vpop.xlane.xlu0 %491
      %v493 = vsel %vm269, %v441, 0.0
      %494 = vadd.xlane.f32.xlu0 %v493
      %v495 = vpop.xlane.xlu0 %494
      %v496 = vsel %vm269, %v442, 0.0
      %497 = vadd.xlane.f32.xlu0 %v496
      %v498 = vpop.xlane.xlu0 %497
      %v499 = vsel %vm269, %v443, 0.0
      %500 = vadd.xlane.f32.xlu0 %v499
      %v501 = vpop.xlane.xlu0 %500
      %v502 = vsel %vm269, %v444, 0.0
      %503 = vadd.xlane.f32.xlu0 %v502
      %v504 = vpop.xlane.xlu0 %503
      %v505 = vsel %vm269, %v445, 0.0
      %506 = vadd.xlane.f32.xlu0 %v505
      %v507 = vpop.xlane.xlu0 %506
      %v508 = vsel %vm269, %v446, 0.0
      %509 = vadd.xlane.f32.xlu0 %v508
      %v510 = vpop.xlane.xlu0 %509
      %v511 = vsel %vm269, %v447, 0.0
      %512 = vadd.xlane.f32.xlu0 %v511
      %v513 = vpop.xlane.xlu0 %512
      %v514 = vsel %vm269, %v448, 0.0
      %515 = vadd.xlane.f32.xlu0 %v514
      %v516 = vpop.xlane.xlu0 %515
      %v517 = vsel %vm269, %v449, 0.0
      %518 = vadd.xlane.f32.xlu0 %v517
      %v519 = vpop.xlane.xlu0 %518
      %v520 = vsel %vm269, %v450, 0.0
      %521 = vadd.xlane.f32.xlu0 %v520
      %v522 = vpop.xlane.xlu0 %521
      %v523 = vsel %vm269, %v451, 0.0
      %524 = vadd.xlane.f32.xlu0 %v523
      %v525 = vpop.xlane.xlu0 %524
      %v526 = vsel %vm269, %v452, 0.0
      %527 = vadd.xlane.f32.xlu0 %v526
      %v528 = vpop.xlane.xlu0 %527
      %v529 = vsel %vm269, %v453, 0.0
      %530 = vadd.xlane.f32.xlu0 %v529
      %v531 = vpop.xlane.xlu0 %530
      %v532 = vsel %vm269, %v454, 0.0
      %533 = vadd.xlane.f32.xlu0 %v532
      %v534 = vpop.xlane.xlu0 %533
      %v535 = vsel %vm269, %v455, 0.0
      %536 = vadd.xlane.f32.xlu0 %v535
      %v537 = vpop.xlane.xlu0 %536
      %v538 = vsel %vm269, %v456, 0.0
      %539 = vadd.xlane.f32.xlu0 %v538
      %v540 = vpop.xlane.xlu0 %539
      %v541 = vsel %vm269, %v457, 0.0
      %542 = vadd.xlane.f32.xlu0 %v541
      %v543 = vpop.xlane.xlu0 %542
      %v544 = vsel %vm269, %v458, 0.0
      %545 = vadd.xlane.f32.xlu0 %v544
      %v546 = vpop.xlane.xlu0 %545
      %v547 = vsel %vm269, %v459, 0.0
      %548 = vadd.xlane.f32.xlu0 %v547
      %v549 = vpop.xlane.xlu0 %548
      %v550 = vsel %vm269, %v460, 0.0
      %551 = vadd.xlane.f32.xlu0 %v550
      %v552 = vpop.xlane.xlu0 %551
      %v553 = vsel %vm269, %v461, 0.0
      %554 = vadd.xlane.f32.xlu0 %v553
      %v555 = vpop.xlane.xlu0 %554
      %v556 = vsel %vm269, %v462, 0.0
      %557 = vadd.xlane.f32.xlu0 %v556
      %v558 = vpop.xlane.xlu0 %557
      %v559 = vmul.f32 %v465, %v366
      %v560 = vmul.f32 %v468, %v366
      %v561 = vmul.f32 %v471, %v366
      %v562 = vmul.f32 %v474, %v366
      %v563 = vmul.f32 %v477, %v366
      %v564 = vmul.f32 %v480, %v366
      %v565 = vmul.f32 %v483, %v366
      %v566 = vmul.f32 %v486, %v366
      %v567 = vmul.f32 %v489, %v366
      %v568 = vmul.f32 %v492, %v366
      %v569 = vmul.f32 %v495, %v366
      %v570 = vmul.f32 %v498, %v366
      %v571 = vmul.f32 %v501, %v366
      %v572 = vmul.f32 %v504, %v366
      %v573 = vmul.f32 %v507, %v366
      %v574 = vmul.f32 %v510, %v366
      %v575 = vmul.f32 %v513, %v366
      %v576 = vmul.f32 %v516, %v366
      %v577 = vmul.f32 %v519, %v366
      %v578 = vmul.f32 %v522, %v366
      %v579 = vmul.f32 %v525, %v366
      %v580 = vmul.f32 %v528, %v366
      %v581 = vmul.f32 %v531, %v366
      %v582 = vmul.f32 %v534, %v366
      %v583 = vmul.f32 %v537, %v366
      %v584 = vmul.f32 %v540, %v366
      %v585 = vmul.f32 %v543, %v366
      %v586 = vmul.f32 %v546, %v366
      %v587 = vmul.f32 %v549, %v366
      %v588 = vmul.f32 %v552, %v366
      %v589 = vmul.f32 %v555, %v366
      %v590 = vmul.f32 %v558, %v366
      %v591 = vadd.f32 %v559, 1e-06
      %v592 = vadd.f32 %v560, 1e-06
      %v593 = vadd.f32 %v561, 1e-06
      %v594 = vadd.f32 %v562, 1e-06
      %v595 = vadd.f32 %v563, 1e-06
      %v596 = vadd.f32 %v564, 1e-06
      %v597 = vadd.f32 %v565, 1e-06
      %v598 = vadd.f32 %v566, 1e-06
      %v599 = vadd.f32 %v567, 1e-06
      %v600 = vadd.f32 %v568, 1e-06
      %v601 = vadd.f32 %v569, 1e-06
      %v602 = vadd.f32 %v570, 1e-06
      %v603 = vadd.f32 %v571, 1e-06
      %v604 = vadd.f32 %v572, 1e-06
      %v605 = vadd.f32 %v573, 1e-06
      %v606 = vadd.f32 %v574, 1e-06
      %v607 = vadd.f32 %v575, 1e-06
      %v608 = vadd.f32 %v576, 1e-06
      %v609 = vadd.f32 %v577, 1e-06
      %v610 = vadd.f32 %v578, 1e-06
      %v611 = vadd.f32 %v579, 1e-06
      %v612 = vadd.f32 %v580, 1e-06
      %v613 = vadd.f32 %v581, 1e-06
      %v614 = vadd.f32 %v582, 1e-06
      %v615 = vadd.f32 %v583, 1e-06
      %v616 = vadd.f32 %v584, 1e-06
      %v617 = vadd.f32 %v585, 1e-06
      %v618 = vadd.f32 %v586, 1e-06
      %v619 = vadd.f32 %v587, 1e-06
      %v620 = vadd.f32 %v588, 1e-06
      %v621 = vadd.f32 %v589, 1e-06
      %v622 = vadd.f32 %v590, 1e-06
      %v623 = vrsqrt.pop %v591
      %v624 = vrsqrt.pop %v592
      %v625 = vrsqrt.pop %v593
      %v626 = vrsqrt.pop %v594
      %v627 = vrsqrt.pop %v595
      %v628 = vrsqrt.pop %v596
      %v629 = vrsqrt.pop %v597
      %v630 = vrsqrt.pop %v598
      %v631 = vrsqrt.pop %v599
      %v632 = vrsqrt.pop %v600
      %v633 = vrsqrt.pop %v601
      %v634 = vrsqrt.pop %v602
      %v635 = vrsqrt.pop %v603
      %v636 = vrsqrt.pop %v604
      %v637 = vrsqrt.pop %v605
      %v638 = vrsqrt.pop %v606
      %v639 = vrsqrt.pop %v607
      %v640 = vrsqrt.pop %v608
      %v641 = vrsqrt.pop %v609
      %v642 = vrsqrt.pop %v610
      %v643 = vrsqrt.pop %v611
      %v644 = vrsqrt.pop %v612
      %v645 = vrsqrt.pop %v613
      %v646 = vrsqrt.pop %v614
      %v647 = vrsqrt.pop %v615
      %v648 = vrsqrt.pop %v616
      %v649 = vrsqrt.pop %v617
      %v650 = vrsqrt.pop %v618
      %v651 = vrsqrt.pop %v619
      %v652 = vrsqrt.pop %v620
      %v653 = vrsqrt.pop %v621
      %v654 = vrsqrt.pop %v622
      %v655 = vmul.f32 %v399, %v623
      %v656 = vmul.f32 %v400, %v624
      %v657 = vmul.f32 %v401, %v625
      %v658 = vmul.f32 %v402, %v626
      %v659 = vmul.f32 %v403, %v627
      %v660 = vmul.f32 %v404, %v628
      %v661 = vmul.f32 %v405, %v629
      %v662 = vmul.f32 %v406, %v630
      %v663 = vmul.f32 %v407, %v631
      %v664 = vmul.f32 %v408, %v632
      %v665 = vmul.f32 %v409, %v633
      %v666 = vmul.f32 %v410, %v634
      %v667 = vmul.f32 %v411, %v635
      %v668 = vmul.f32 %v412, %v636
      %v669 = vmul.f32 %v413, %v637
      %v670 = vmul.f32 %v414, %v638
      %v671 = vmul.f32 %v415, %v639
      %v672 = vmul.f32 %v416, %v640
      %v673 = vmul.f32 %v417, %v641
      %v674 = vmul.f32 %v418, %v642
      %v675 = vmul.f32 %v419, %v643
      %v676 = vmul.f32 %v420, %v644
      %v677 = vmul.f32 %v421, %v645
      %v678 = vmul.f32 %v422, %v646
      %v679 = vmul.f32 %v423, %v647
      %v680 = vmul.f32 %v424, %v648
      %v681 = vmul.f32 %v425, %v649
      %v682 = vmul.f32 %v426, %v650
      %v683 = vmul.f32 %v427, %v651
      %v684 = vmul.f32 %v428, %v652
      %v685 = vmul.f32 %v429, %v653
      %v686 = vmul.f32 %v430, %v654
      %v687 = vld [vmem:[%s1] sm:$0x1]
      %v689 = vlaneseq
      %v690 = vshrl.u32 %v689, 7
      %v691 = vsub.s32 0, %v690
      %v692 = vrot.slane %v687, %v691
      %v694 = vmul.f32 %v655, %v692
      %v695 = vmul.f32 %v656, %v692
      %v696 = vmul.f32 %v657, %v692
      %v697 = vmul.f32 %v658, %v692
      %v698 = vmul.f32 %v659, %v692
      %v699 = vmul.f32 %v660, %v692
      %v700 = vmul.f32 %v661, %v692
      %v701 = vmul.f32 %v662, %v692
      %v702 = vmul.f32 %v663, %v692
      %v703 = vmul.f32 %v664, %v692
      %v704 = vmul.f32 %v665, %v692
      %v705 = vmul.f32 %v666, %v692
      %v706 = vmul.f32 %v667, %v692
      %v707 = vmul.f32 %v668, %v692
      %v708 = vmul.f32 %v669, %v692
      %v709 = vmul.f32 %v670, %v692
      %v710 = vmul.f32 %v671, %v692
      %v711 = vmul.f32 %v672, %v692
      %v712 = vmul.f32 %v673, %v692
      %v713 = vmul.f32 %v674, %v692
      %v714 = vmul.f32 %v675, %v692
      %v715 = vmul.f32 %v676, %v692
      %v716 = vmul.f32 %v677, %v692
      %v717 = vmul.f32 %v678, %v692
      %v718 = vmul.f32 %v679, %v692
      %v719 = vmul.f32 %v680, %v692
      %v720 = vmul.f32 %v681, %v692
      %v721 = vmul.f32 %v682, %v692
      %v722 = vmul.f32 %v683, %v692
      %v723 = vmul.f32 %v684, %v692
      %v724 = vmul.f32 %v685, %v692
      %v725 = vmul.f32 %v686, %v692
      %v726 = vld [vmem:[%s2] sm:$0x1]
      %v728 = vlaneseq
      %v729 = vshrl.u32 %v728, 7
      %v730 = vsub.s32 0, %v729
      %v731 = vrot.slane %v726, %v730
      %v733 = vadd.f32 %v694, %v731
      %v734 = vadd.f32 %v695, %v731
      %v735 = vadd.f32 %v696, %v731
      %v736 = vadd.f32 %v697, %v731
      %v737 = vadd.f32 %v698, %v731
      %v738 = vadd.f32 %v699, %v731
      %v739 = vadd.f32 %v700, %v731
      %v740 = vadd.f32 %v701, %v731
      %v741 = vadd.f32 %v702, %v731
      %v742 = vadd.f32 %v703, %v731
      %v743 = vadd.f32 %v704, %v731
      %v744 = vadd.f32 %v705, %v731
      %v745 = vadd.f32 %v706, %v731
      %v746 = vadd.f32 %v707, %v731
      %v747 = vadd.f32 %v708, %v731
      %v748 = vadd.f32 %v709, %v731
      %v749 = vadd.f32 %v710, %v731
      %v750 = vadd.f32 %v711, %v731
      %v751 = vadd.f32 %v712, %v731
      %v752 = vadd.f32 %v713, %v731
      %v753 = vadd.f32 %v714, %v731
      %v754 = vadd.f32 %v715, %v731
      %v755 = vadd.f32 %v716, %v731
      %v756 = vadd.f32 %v717, %v731
      %v757 = vadd.f32 %v718, %v731
      %v758 = vadd.f32 %v719, %v731
      %v759 = vadd.f32 %v720, %v731
      %v760 = vadd.f32 %v721, %v731
      %v761 = vadd.f32 %v722, %v731
      %v762 = vadd.f32 %v723, %v731
      %v763 = vadd.f32 %v724, %v731
      %v764 = vadd.f32 %v725, %v731
      %v765 = vld [vmem:[%s3] sm:$0xff]
      %v766 = vld [vmem:[%s3 + $0x8] sm:$0xff]
      %v767 = vld [vmem:[%s3 + $0x10] sm:$0xff]
      %v768 = vld [vmem:[%s3 + $0x18] sm:$0xff]
      %v770 = vsel %vm269, %v733, 0
      %v773 = vsel %vm269, %v734, 0
      %v776 = vsel %vm269, %v735, 0
      %v779 = vsel %vm269, %v736, 0
      %v782 = vsel %vm269, %v737, 0
      %v785 = vsel %vm269, %v738, 0
      %v788 = vsel %vm269, %v739, 0
      %v791 = vsel %vm269, %v740, 0
      %v794 = vsel %vm269, %v741, 0
      %v797 = vsel %vm269, %v742, 0
      %v800 = vsel %vm269, %v743, 0
      %v803 = vsel %vm269, %v744, 0
      %v806 = vsel %vm269, %v745, 0
      %v809 = vsel %vm269, %v746, 0
      %v812 = vsel %vm269, %v747, 0
      %v815 = vsel %vm269, %v748, 0
      %v818 = vsel %vm269, %v749, 0
      %v821 = vsel %vm269, %v750, 0
      %v824 = vsel %vm269, %v751, 0
      %v827 = vsel %vm269, %v752, 0
      %v830 = vsel %vm269, %v753, 0
      %v833 = vsel %vm269, %v754, 0
      %v836 = vsel %vm269, %v755, 0
      %v839 = vsel %vm269, %v756, 0
      %v842 = vsel %vm269, %v757, 0
      %v845 = vsel %vm269, %v758, 0
      %v848 = vsel %vm269, %v759, 0
      %v851 = vsel %vm269, %v760, 0
      %v854 = vsel %vm269, %v761, 0
      %v857 = vsel %vm269, %v762, 0
      %v860 = vsel %vm269, %v763, 0
      %v863 = vsel %vm269, %v764, 0
      %865 = vmatprep.subr.mxu0 0.0
      %v866 = vand.u32 %v765, 4294901760
      %867 = vmatpush1.msra.mxu0 %v866
      %868 = vmatprep.subr.mxu0 0.0
      %v869 = vand.u32 %v766, 4294901760
      %870 = vmatpush1.msra.mxu0 %v869
      %871 = vmatprep.subr.mxu0 0.0
      %v872 = vand.u32 %v767, 4294901760
      %873 = vmatpush1.msra.mxu0 %v872
      %874 = vmatprep.subr.mxu0 0.0
      %v875 = vand.u32 %v768, 4294901760
      %876 = vmatpush1.msra.mxu0 %v875
      %877 = vmatprep.subr.mxu0 0.0
      %878 = vmatpush1.msra.mxu0 0.0
      %879 = vmatprep.subr.mxu0 0.0
      %880 = vmatpush1.msra.mxu0 0.0
      %881 = vmatprep.subr.mxu0 0.0
      %882 = vmatpush1.msra.mxu0 0.0
      %883 = vmatprep.subr.mxu0 0.0
      %884 = vmatpush1.msra.mxu0 0.0
      %885 = vmatprep.subr.mxu0 0.0
      %886 = vmatpush1.msra.mxu0 0.0
      %887 = vmatprep.subr.mxu0 0.0
      %888 = vmatpush1.msra.mxu0 0.0
      %889 = vmatprep.subr.mxu0 0.0
      %890 = vmatpush1.msra.mxu0 0.0
      %891 = vmatprep.subr.mxu0 0.0
      %892 = vmatpush1.msra.mxu0 0.0
      %893 = vmatprep.subr.mxu0 0.0
      %894 = vmatpush1.msra.mxu0 0.0
      %895 = vmatprep.subr.mxu0 0.0
      %896 = vmatpush1.msra.mxu0 0.0
      %897 = vmatprep.subr.mxu0 0.0
      %898 = vmatpush1.msra.mxu0 0.0
      %899 = vmatprep.subr.mxu0 0.0
      %900 = vmatpush1.msra.mxu0 0.0
      %901 = vmatprep.subr.mxu0 0.0
      %902 = vmatpush1.msra.mxu0 0.0
      %903 = vmatprep.subr.mxu0 0.0
      %904 = vmatpush1.msra.mxu0 0.0
      %905 = vmatprep.subr.mxu0 0.0
      %906 = vmatpush1.msra.mxu0 0.0
      %907 = vmatprep.subr.mxu0 0.0
      %908 = vmatpush1.msra.mxu0 0.0
      %909 = vmatprep.subr.mxu0 0.0
      %910 = vmatpush1.msra.mxu0 0.0
      %911 = vmatprep.subr.mxu0 0.0
      %912 = vmatpush1.msra.mxu0 0.0
      %913 = vmatprep.subr.mxu0 0.0
      %914 = vmatpush1.msra.mxu0 0.0
      %915 = vmatprep.subr.mxu0 0.0
      %916 = vmatpush1.msra.mxu0 0.0
      %917 = vmatprep.subr.mxu0 0.0
      %918 = vmatpush1.msra.mxu0 0.0
      %919 = vmatprep.subr.mxu0 0.0
      %920 = vmatpush1.msra.mxu0 0.0
      %921 = vmatprep.subr.mxu0 0.0
      %922 = vmatpush1.msra.mxu0 0.0
      %923 = vmatprep.subr.mxu0 0.0
      %924 = vmatpush1.msra.mxu0 0.0
      %925 = vmatprep.subr.mxu0 0.0
      %926 = vmatpush1.msra.mxu0 0.0
      %927 = vmatprep.subr.mxu0 0.0
      %928 = vmatpush1.msra.mxu0 0.0
      %929 = vmatprep.subr.mxu0 0.0
      %930 = vmatpush1.msra.mxu0 0.0
      %931 = vmatprep.subr.mxu0 0.0
      %932 = vmatpush1.msra.mxu0 0.0
      %933 = vmatprep.mubr.f32.mxu0 0.0
      %v934 = vand.u32 %v770, 4294901760
      %v935 = vsub.f32 %v770, %v934
      %v936 = vand.u32 %v935, 4294901760
      %v937 = vsub.f32 %v935, %v936
      %v938 = vand.u32 %v937, 4294901760
      %939 = vmatmul.mubr.f32.gmra.mrb[0].mxu0 %v938
      %v940 = vpop.f32.mrb[0].mxu0
      %v941 = vadd.f32 0.0, %v940
      %v942 = vpop.f32.mrb[0].mxu0
      %943 = vmatprep.mubr.f32.mxu0 0.0
      %v944 = vand.u32 %v773, 4294901760
      %v945 = vsub.f32 %v773, %v944
      %v946 = vand.u32 %v945, 4294901760
      %v947 = vsub.f32 %v945, %v946
      %v948 = vand.u32 %v947, 4294901760
      %949 = vmatmul.mubr.f32.gmra.mrb[0].mxu0 %v948
      %v950 = vpop.f32.mrb[0].mxu0
      %v951 = vadd.f32 0.0, %v950
      %v952 = vpop.f32.mrb[0].mxu0
      %953 = vmatprep.mubr.f32.mxu0 0.0
      %v954 = vand.u32 %v776, 4294901760
      %v955 = vsub.f32 %v776, %v954
      %v956 = vand.u32 %v955, 4294901760
      %v957 = vsub.f32 %v955, %v956
      %v958 = vand.u32 %v957, 4294901760
      %959 = vmatmul.mubr.f32.gmra.mrb[0].mxu0 %v958
      %v960 = vpop.f32.mrb[0].mxu0
      %v961 = vadd.f32 0.0, %v960
      %v962 = vpop.f32.mrb[0].mxu0
      %963 = vmatprep.mubr.f32.mxu0 0.0
      %v964 = vand.u32 %v779, 4294901760
      %v965 = vsub.f32 %v779, %v964
      %v966 = vand.u32 %v965, 4294901760
      %v967 = vsub.f32 %v965, %v966
      %v968 = vand.u32 %v967, 4294901760
      %969 = vmatmul.mubr.f32.gmra.mrb[0].mxu0 %v968
      %v970 = vpop.f32.mrb[0].mxu0
      %v971 = vadd.f32 0.0, %v970
      %v972 = vpop.f32.mrb[0].mxu0
      %973 = vmatprep.mubr.f32.mxu0 0.0
      %v974 = vand.u32 %v782, 4294901760
      %v975 = vsub.f32 %v782, %v974
      %v976 = vand.u32 %v975, 4294901760
      %v977 = vsub.f32 %v975, %v976
      %v978 = vand.u32 %v977, 4294901760
      %979 = vmatmul.mubr.f32.gmra.mrb[0].mxu0 %v978
      %v980 = vpop.f32.mrb[0].mxu0
      %v981 = vadd.f32 0.0, %v980
      %v982 = vpop.f32.mrb[0].mxu0
      %983 = vmatprep.mubr.f32.mxu0 0.0
      %v984 = vand.u32 %v785, 4294901760
      %v985 = vsub.f32 %v785, %v984
      %v986 = vand.u32 %v985, 4294901760
      %v987 = vsub.f32 %v985, %v986
      %v988 = vand.u32 %v987, 4294901760
      %989 = vmatmul.mubr.f32.gmra.mrb[0].mxu0 %v988
      %v990 = vpop.f32.mrb[0].mxu0
      %v991 = vadd.f32 0.0, %v990
      %v992 = vpop.f32.mrb[0].mxu0
      %993 = vmatprep.mubr.f32.mxu0 0.0
      %v994 = vand.u32 %v788, 4294901760
      %v995 = vsub.f32 %v788, %v994
      %v996 = vand.u32 %v995, 4294901760
      %v997 = vsub.f32 %v995, %v996
      %v998 = vand.u32 %v997, 4294901760
      %999 = vmatmul.mubr.f32.gmra.mrb[0].mxu0 %v998
      %v1000 = vpop.f32.mrb[0].mxu0
      %v1001 = vadd.f32 0.0, %v1000
      %v1002 = vpop.f32.mrb[0].mxu0
      %1003 = vmatprep.mubr.f32.mxu0 0.0
      %v1004 = vand.u32 %v791, 4294901760
      %v1005 = vsub.f32 %v791, %v1004
      %v1006 = vand.u32 %v1005, 4294901760
      %v1007 = vsub.f32 %v1005, %v1006
      %v1008 = vand.u32 %v1007, 4294901760
      %1009 = vmatmul.mubr.f32.gmra.mrb[0].mxu0 %v1008
      %v1010 = vpop.f32.mrb[0].mxu0
      %v1011 = vadd.f32 0.0, %v1010
      %v1012 = vpop.f32.mrb[0].mxu0
      %1013 = vmatprep.mubr.f32.mxu0 0.0
      %v1014 = vand.u32 %v794, 4294901760
      %v1015 = vsub.f32 %v794, %v1014
      %v1016 = vand.u32 %v1015, 4294901760
      %v1017 = vsub.f32 %v1015, %v1016
      %v1018 = vand.u32 %v1017, 4294901760
      %1019 = vmatmul.mubr.f32.gmra.mrb[0].mxu0 %v1018
      %v1020 = vpop.f32.mrb[0].mxu0
      %v1021 = vadd.f32 0.0, %v1020
      %v1022 = vpop.f32.mrb[0].mxu0
      %1023 = vmatprep.mubr.f32.mxu0 0.0
      %v1024 = vand.u32 %v797, 4294901760
      %v1025 = vsub.f32 %v797, %v1024
      %v1026 = vand.u32 %v1025, 4294901760
      %v1027 = vsub.f32 %v1025, %v1026
      %v1028 = vand.u32 %v1027, 4294901760
      %1029 = vmatmul.mubr.f32.gmra.mrb[0].mxu0 %v1028
      %v1030 = vpop.f32.mrb[0].mxu0
      %v1031 = vadd.f32 0.0, %v1030
      %v1032 = vpop.f32.mrb[0].mxu0
      %1033 = vmatprep.mubr.f32.mxu0 0.0
      %v1034 = vand.u32 %v800, 4294901760
      %v1035 = vsub.f32 %v800, %v1034
      %v1036 = vand.u32 %v1035, 4294901760
      %v1037 = vsub.f32 %v1035, %v1036
      %v1038 = vand.u32 %v1037, 4294901760
      %1039 = vmatmul.mubr.f32.gmra.mrb[0].mxu0 %v1038
      %v1040 = vpop.f32.mrb[0].mxu0
      %v1041 = vadd.f32 0.0, %v1040
      %v1042 = vpop.f32.mrb[0].mxu0
      %1043 = vmatprep.mubr.f32.mxu0 0.0
      %v1044 = vand.u32 %v803, 4294901760
      %v1045 = vsub.f32 %v803, %v1044
      %v1046 = vand.u32 %v1045, 4294901760
      %v1047 = vsub.f32 %v1045, %v1046
      %v1048 = vand.u32 %v1047, 4294901760
      %1049 = vmatmul.mubr.f32.gmra.mrb[0].mxu0 %v1048
      %v1050 = vpop.f32.mrb[0].mxu0
      %v1051 = vadd.f32 0.0, %v1050
      %v1052 = vpop.f32.mrb[0].mxu0
      %1053 = vmatprep.mubr.f32.mxu0 0.0
      %v1054 = vand.u32 %v806, 4294901760
      %v1055 = vsub.f32 %v806, %v1054
      %v1056 = vand.u32 %v1055, 4294901760
      %v1057 = vsub.f32 %v1055, %v1056
      %v1058 = vand.u32 %v1057, 4294901760
      %1059 = vmatmul.mubr.f32.gmra.mrb[0].mxu0 %v1058
      %v1060 = vpop.f32.mrb[0].mxu0
      %v1061 = vadd.f32 0.0, %v1060
      %v1062 = vpop.f32.mrb[0].mxu0
      %1063 = vmatprep.mubr.f32.mxu0 0.0
      %v1064 = vand.u32 %v809, 4294901760
      %v1065 = vsub.f32 %v809, %v1064
      %v1066 = vand.u32 %v1065, 4294901760
      %v1067 = vsub.f32 %v1065, %v1066
      %v1068 = vand.u32 %v1067, 4294901760
      %1069 = vmatmul.mubr.f32.gmra.mrb[0].mxu0 %v1068
      %v1070 = vpop.f32.mrb[0].mxu0
      %v1071 = vadd.f32 0.0, %v1070
      %v1072 = vpop.f32.mrb[0].mxu0
      %1073 = vmatprep.mubr.f32.mxu0 0.0
      %v1074 = vand.u32 %v812, 4294901760
      %v1075 = vsub.f32 %v812, %v1074
      %v1076 = vand.u32 %v1075, 4294901760
      %v1077 = vsub.f32 %v1075, %v1076
      %v1078 = vand.u32 %v1077, 4294901760
      %1079 = vmatmul.mubr.f32.gmra.mrb[0].mxu0 %v1078
      %v1080 = vpop.f32.mrb[0].mxu0
      %v1081 = vadd.f32 0.0, %v1080
      %v1082 = vpop.f32.mrb[0].mxu0
      %1083 = vmatprep.mubr.f32.mxu0 0.0
      %v1084 = vand.u32 %v815, 4294901760
      %v1085 = vsub.f32 %v815, %v1084
      %v1086 = vand.u32 %v1085, 4294901760
      %v1087 = vsub.f32 %v1085, %v1086
      %v1088 = vand.u32 %v1087, 4294901760
      %1089 = vmatmul.mubr.f32.gmra.mrb[0].mxu0 %v1088
      %v1090 = vpop.f32.mrb[0].mxu0
      %v1091 = vadd.f32 0.0, %v1090
      %v1092 = vpop.f32.mrb[0].mxu0
      %1093 = vmatprep.mubr.f32.mxu0 0.0
      %v1094 = vand.u32 %v818, 4294901760
      %v1095 = vsub.f32 %v818, %v1094
      %v1096 = vand.u32 %v1095, 4294901760
      %v1097 = vsub.f32 %v1095, %v1096
      %v1098 = vand.u32 %v1097, 4294901760
      %1099 = vmatmul.mubr.f32.gmra.mrb[0].mxu0 %v1098
      %v1100 = vpop.f32.mrb[0].mxu0
      %v1101 = vadd.f32 0.0, %v1100
      %v1102 = vpop.f32.mrb[0].mxu0
      %1103 = vmatprep.mubr.f32.mxu0 0.0
      %v1104 = vand.u32 %v821, 4294901760
      %v1105 = vsub.f32 %v821, %v1104
      %v1106 = vand.u32 %v1105, 4294901760
      %v1107 = vsub.f32 %v1105, %v1106
      %v1108 = vand.u32 %v1107, 4294901760
      %1109 = vmatmul.mubr.f32.gmra.mrb[0].mxu0 %v1108
      %v1110 = vpop.f32.mrb[0].mxu0
      %v1111 = vadd.f32 0.0, %v1110
      %v1112 = vpop.f32.mrb[0].mxu0
      %1113 = vmatprep.mubr.f32.mxu0 0.0
      %v1114 = vand.u32 %v824, 4294901760
      %v1115 = vsub.f32 %v824, %v1114
      %v1116 = vand.u32 %v1115, 4294901760
      %v1117 = vsub.f32 %v1115, %v1116
      %v1118 = vand.u32 %v1117, 4294901760
      %1119 = vmatmul.mubr.f32.gmra.mrb[0].mxu0 %v1118
      %v1120 = vpop.f32.mrb[0].mxu0
      %v1121 = vadd.f32 0.0, %v1120
      %v1122 = vpop.f32.mrb[0].mxu0
      %1123 = vmatprep.mubr.f32.mxu0 0.0
      %v1124 = vand.u32 %v827, 4294901760
      %v1125 = vsub.f32 %v827, %v1124
      %v1126 = vand.u32 %v1125, 4294901760
      %v1127 = vsub.f32 %v1125, %v1126
      %v1128 = vand.u32 %v1127, 4294901760
      %1129 = vmatmul.mubr.f32.gmra.mrb[0].mxu0 %v1128
      %v1130 = vpop.f32.mrb[0].mxu0
      %v1131 = vadd.f32 0.0, %v1130
      %v1132 = vpop.f32.mrb[0].mxu0
      %1133 = vmatprep.mubr.f32.mxu0 0.0
      %v1134 = vand.u32 %v830, 4294901760
      %v1135 = vsub.f32 %v830, %v1134
      %v1136 = vand.u32 %v1135, 4294901760
      %v1137 = vsub.f32 %v1135, %v1136
      %v1138 = vand.u32 %v1137, 4294901760
      %1139 = vmatmul.mubr.f32.gmra.mrb[0].mxu0 %v1138
      %v1140 = vpop.f32.mrb[0].mxu0
      %v1141 = vadd.f32 0.0, %v1140
      %v1142 = vpop.f32.mrb[0].mxu0
      %1143 = vmatprep.mubr.f32.mxu0 0.0
      %v1144 = vand.u32 %v833, 4294901760
      %v1145 = vsub.f32 %v833, %v1144
      %v1146 = vand.u32 %v1145, 4294901760
      %v1147 = vsub.f32 %v1145, %v1146
      %v1148 = vand.u32 %v1147, 4294901760
      %1149 = vmatmul.mubr.f32.gmra.mrb[0].mxu0 %v1148
      %v1150 = vpop.f32.mrb[0].mxu0
      %v1151 = vadd.f32 0.0, %v1150
      %v1152 = vpop.f32.mrb[0].mxu0
      %1153 = vmatprep.mubr.f32.mxu0 0.0
      %v1154 = vand.u32 %v836, 4294901760
      %v1155 = vsub.f32 %v836, %v1154
      %v1156 = vand.u32 %v1155, 4294901760
      %v1157 = vsub.f32 %v1155, %v1156
      %v1158 = vand.u32 %v1157, 4294901760
      %1159 = vmatmul.mubr.f32.gmra.mrb[0].mxu0 %v1158
      %v1160 = vpop.f32.mrb[0].mxu0
      %v1161 = vadd.f32 0.0, %v1160
      %v1162 = vpop.f32.mrb[0].mxu0
      %1163 = vmatprep.mubr.f32.mxu0 0.0
      %v1164 = vand.u32 %v839, 4294901760
      %v1165 = vsub.f32 %v839, %v1164
      %v1166 = vand.u32 %v1165, 4294901760
      %v1167 = vsub.f32 %v1165, %v1166
      %v1168 = vand.u32 %v1167, 4294901760
      %1169 = vmatmul.mubr.f32.gmra.mrb[0].mxu0 %v1168
      %v1170 = vpop.f32.mrb[0].mxu0
      %v1171 = vadd.f32 0.0, %v1170
      %v1172 = vpop.f32.mrb[0].mxu0
      %1173 = vmatprep.mubr.f32.mxu0 0.0
      %v1174 = vand.u32 %v842, 4294901760
      %v1175 = vsub.f32 %v842, %v1174
      %v1176 = vand.u32 %v1175, 4294901760
      %v1177 = vsub.f32 %v1175, %v1176
      %v1178 = vand.u32 %v1177, 4294901760
      %1179 = vmatmul.mubr.f32.gmra.mrb[0].mxu0 %v1178
      %v1180 = vpop.f32.mrb[0].mxu0
      %v1181 = vadd.f32 0.0, %v1180
      %v1182 = vpop.f32.mrb[0].mxu0
      %1183 = vmatprep.mubr.f32.mxu0 0.0
      %v1184 = vand.u32 %v845, 4294901760
      %v1185 = vsub.f32 %v845, %v1184
      %v1186 = vand.u32 %v1185, 4294901760
      %v1187 = vsub.f32 %v1185, %v1186
      %v1188 = vand.u32 %v1187, 4294901760
      %1189 = vmatmul.mubr.f32.gmra.mrb[0].mxu0 %v1188
      %v1190 = vpop.f32.mrb[0].mxu0
      %v1191 = vadd.f32 0.0, %v1190
      %v1192 = vpop.f32.mrb[0].mxu0
      %1193 = vmatprep.mubr.f32.mxu0 0.0
      %v1194 = vand.u32 %v848, 4294901760
      %v1195 = vsub.f32 %v848, %v1194
      %v1196 = vand.u32 %v1195, 4294901760
      %v1197 = vsub.f32 %v1195, %v1196
      %v1198 = vand.u32 %v1197, 4294901760
      %1199 = vmatmul.mubr.f32.gmra.mrb[0].mxu0 %v1198
      %v1200 = vpop.f32.mrb[0].mxu0
      %v1201 = vadd.f32 0.0, %v1200
      %v1202 = vpop.f32.mrb[0].mxu0
      %1203 = vmatprep.mubr.f32.mxu0 0.0
      %v1204 = vand.u32 %v851, 4294901760
      %v1205 = vsub.f32 %v851, %v1204
      %v1206 = vand.u32 %v1205, 4294901760
      %v1207 = vsub.f32 %v1205, %v1206
      %v1208 = vand.u32 %v1207, 4294901760
      %1209 = vmatmul.mubr.f32.gmra.mrb[0].mxu0 %v1208
      %v1210 = vpop.f32.mrb[0].mxu0
      %v1211 = vadd.f32 0.0, %v1210
      %v1212 = vpop.f32.mrb[0].mxu0
      %1213 = vmatprep.mubr.f32.mxu0 0.0
      %v1214 = vand.u32 %v854, 4294901760
      %v1215 = vsub.f32 %v854, %v1214
      %v1216 = vand.u32 %v1215, 4294901760
      %v1217 = vsub.f32 %v1215, %v1216
      %v1218 = vand.u32 %v1217, 4294901760
      %1219 = vmatmul.mubr.f32.gmra.mrb[0].mxu0 %v1218
      %v1220 = vpop.f32.mrb[0].mxu0
      %v1221 = vadd.f32 0.0, %v1220
      %v1222 = vpop.f32.mrb[0].mxu0
      %1223 = vmatprep.mubr.f32.mxu0 0.0
      %v1224 = vand.u32 %v857, 4294901760
      %v1225 = vsub.f32 %v857, %v1224
      %v1226 = vand.u32 %v1225, 4294901760
      %v1227 = vsub.f32 %v1225, %v1226
      %v1228 = vand.u32 %v1227, 4294901760
      %1229 = vmatmul.mubr.f32.gmra.mrb[0].mxu0 %v1228
      %v1230 = vpop.f32.mrb[0].mxu0
      %v1231 = vadd.f32 0.0, %v1230
      %v1232 = vpop.f32.mrb[0].mxu0
      %1233 = vmatprep.mubr.f32.mxu0 0.0
      %v1234 = vand.u32 %v860, 4294901760
      %v1235 = vsub.f32 %v860, %v1234
      %v1236 = vand.u32 %v1235, 4294901760
      %v1237 = vsub.f32 %v1235, %v1236
      %v1238 = vand.u32 %v1237, 4294901760
      %1239 = vmatmul.mubr.f32.gmra.mrb[0].mxu0 %v1238
      %v1240 = vpop.f32.mrb[0].mxu0
      %v1241 = vadd.f32 0.0, %v1240
      %v1242 = vpop.f32.mrb[0].mxu0
      %1243 = vmatprep.mubr.f32.mxu0 0.0
      %v1244 = vand.u32 %v863, 4294901760
      %v1245 = vsub.f32 %v863, %v1244
      %v1246 = vand.u32 %v1245, 4294901760
      %v1247 = vsub.f32 %v1245, %v1246
      %v1248 = vand.u32 %v1247, 4294901760
      %1249 = vmatmul.mubr.f32.gmra.mrb[0].mxu0 %v1248
      %v1250 = vpop.f32.mrb[0].mxu0
      %v1251 = vadd.f32 0.0, %v1250
      %v1252 = vpop.f32.mrb[0].mxu0
      %1253 = vdwg.mxu0
      %1254 = vmatprep.subr.mxu0 0.0
      %v1255 = vand.u32 %v765, 4294901760
      %v1256 = vsub.f32 %v765, %v1255
      %v1257 = vand.u32 %v1256, 4294901760
      %v1258 = vsub.f32 %v1256, %v1257
      %v1259 = vand.u32 %v1258, 4294901760
      %1260 = vmatpush1.msra.mxu0 %v1259
      %1261 = vmatprep.subr.mxu0 0.0
      %v1262 = vand.u32 %v766, 4294901760
      %v1263 = vsub.f32 %v766, %v1262
      %v1264 = vand.u32 %v1263, 4294901760
      %v1265 = vsub.f32 %v1263, %v1264
      %v1266 = vand.u32 %v1265, 4294901760
      %1267 = vmatpush1.msra.mxu0 %v1266
      %1268 = vmatprep.subr.mxu0 0.0
      %v1269 = vand.u32 %v767, 4294901760
      %v1270 = vsub.f32 %v767, %v1269
      %v1271 = vand.u32 %v1270, 4294901760
      %v1272 = vsub.f32 %v1270, %v1271
      %v1273 = vand.u32 %v1272, 4294901760
      %1274 = vmatpush1.msra.mxu0 %v1273
      %1275 = vmatprep.subr.mxu0 0.0
      %v1276 = vand.u32 %v768, 4294901760
      %v1277 = vsub.f32 %v768, %v1276
      %v1278 = vand.u32 %v1277, 4294901760
      %v1279 = vsub.f32 %v1277, %v1278
      %v1280 = vand.u32 %v1279, 4294901760
      %1281 = vmatpush1.msra.mxu0 %v1280
      %1282 = vmatprep.subr.mxu0 0.0
      %1283 = vmatpush1.msra.mxu0 0.0
      %1284 = vmatprep.subr.mxu0 0.0
      %1285 = vmatpush1.msra.mxu0 0.0
      %1286 = vmatprep.subr.mxu0 0.0
      %1287 = vmatpush1.msra.mxu0 0.0
      %1288 = vmatprep.subr.mxu0 0.0
      %1289 = vmatpush1.msra.mxu0 0.0
      %1290 = vmatprep.subr.mxu0 0.0
      %1291 = vmatpush1.msra.mxu0 0.0
      %1292 = vmatprep.subr.mxu0 0.0
      %1293 = vmatpush1.msra.mxu0 0.0
      %1294 = vmatprep.subr.mxu0 0.0
      %1295 = vmatpush1.msra.mxu0 0.0
      %1296 = vmatprep.subr.mxu0 0.0
      %1297 = vmatpush1.msra.mxu0 0.0
      %1298 = vmatprep.subr.mxu0 0.0
      %1299 = vmatpush1.msra.mxu0 0.0
      %1300 = vmatprep.subr.mxu0 0.0
      %1301 = vmatpush1.msra.mxu0 0.0
      %1302 = vmatprep.subr.mxu0 0.0
      %1303 = vmatpush1.msra.mxu0 0.0
      %1304 = vmatprep.subr.mxu0 0.0
      %1305 = vmatpush1.msra.mxu0 0.0
      %1306 = vmatprep.subr.mxu0 0.0
      %1307 = vmatpush1.msra.mxu0 0.0
      %1308 = vmatprep.subr.mxu0 0.0
      %1309 = vmatpush1.msra.mxu0 0.0
      %1310 = vmatprep.subr.mxu0 0.0
      %1311 = vmatpush1.msra.mxu0 0.0
      %1312 = vmatprep.subr.mxu0 0.0
      %1313 = vmatpush1.msra.mxu0 0.0
      %1314 = vmatprep.subr.mxu0 0.0
      %1315 = vmatpush1.msra.mxu0 0.0
      %1316 = vmatprep.subr.mxu0 0.0
      %1317 = vmatpush1.msra.mxu0 0.0
      %1318 = vmatprep.subr.mxu0 0.0
      %1319 = vmatpush1.msra.mxu0 0.0
      %1320 = vmatprep.subr.mxu0 0.0
      %1321 = vmatpush1.msra.mxu0 0.0
      %1322 = vmatprep.subr.mxu0 0.0
      %1323 = vmatpush1.msra.mxu0 0.0
      %1324 = vmatprep.subr.mxu0 0.0
      %1325 = vmatpush1.msra.mxu0 0.0
      %1326 = vmatprep.subr.mxu0 0.0
      %1327 = vmatpush1.msra.mxu0 0.0
      %1328 = vmatprep.subr.mxu0 0.0
      %1329 = vmatpush1.msra.mxu0 0.0
      %1330 = vmatprep.subr.mxu0 0.0
      %1331 = vmatpush1.msra.mxu0 0.0
      %1332 = vmatprep.subr.mxu0 0.0
      %1333 = vmatpush1.msra.mxu0 0.0
      %1334 = vmatprep.subr.mxu0 0.0
      %1335 = vmatpush1.msra.mxu0 0.0
      %1336 = vmatprep.subr.mxu0 0.0
      %1337 = vmatpush1.msra.mxu0 0.0
      %1338 = vmatprep.mubr.f32.mxu0 0.0
      %v1339 = vand.u32 %v770, 4294901760
      %1340 = vmatmul.mubr.f32.gmra.mrb[0].mxu0 %v1339
      %v1341 = vpop.f32.mrb[0].mxu0
      %v1342 = vadd.f32 %v941, %v1341
      %v1343 = vpop.f32.mrb[0].mxu0
      %1344 = vmatprep.mubr.f32.mxu0 0.0
      %v1345 = vand.u32 %v773, 4294901760
      %1346 = vmatmul.mubr.f32.gmra.mrb[0].mxu0 %v1345
      %v1347 = vpop.f32.mrb[0].mxu0
      %v1348 = vadd.f32 %v951, %v1347
      %v1349 = vpop.f32.mrb[0].mxu0
      %1350 = vmatprep.mubr.f32.mxu0 0.0
      %v1351 = vand.u32 %v776, 4294901760
      %1352 = vmatmul.mubr.f32.gmra.mrb[0].mxu0 %v1351
      %v1353 = vpop.f32.mrb[0].mxu0
      %v1354 = vadd.f32 %v961, %v1353
      %v1355 = vpop.f32.mrb[0].mxu0
      %1356 = vmatprep.mubr.f32.mxu0 0.0
      %v1357 = vand.u32 %v779, 4294901760
      %1358 = vmatmul.mubr.f32.gmra.mrb[0].mxu0 %v1357
      %v1359 = vpop.f32.mrb[0].mxu0
      %v1360 = vadd.f32 %v971, %v1359
      %v1361 = vpop.f32.mrb[0].mxu0
      %1362 = vmatprep.mubr.f32.mxu0 0.0
      %v1363 = vand.u32 %v782, 4294901760
      %1364 = vmatmul.mubr.f32.gmra.mrb[0].mxu0 %v1363
      %v1365 = vpop.f32.mrb[0].mxu0
      %v1366 = vadd.f32 %v981, %v1365
      %v1367 = vpop.f32.mrb[0].mxu0
      %1368 = vmatprep.mubr.f32.mxu0 0.0
      %v1369 = vand.u32 %v785, 4294901760
      %1370 = vmatmul.mubr.f32.gmra.mrb[0].mxu0 %v1369
      %v1371 = vpop.f32.mrb[0].mxu0
      %v1372 = vadd.f32 %v991, %v1371
      %v1373 = vpop.f32.mrb[0].mxu0
      %1374 = vmatprep.mubr.f32.mxu0 0.0
      %v1375 = vand.u32 %v788, 4294901760
      %1376 = vmatmul.mubr.f32.gmra.mrb[0].mxu0 %v1375
      %v1377 = vpop.f32.mrb[0].mxu0
      %v1378 = vadd.f32 %v1001, %v1377
      %v1379 = vpop.f32.mrb[0].mxu0
      %1380 = vmatprep.mubr.f32.mxu0 0.0
      %v1381 = vand.u32 %v791, 4294901760
      %1382 = vmatmul.mubr.f32.gmra.mrb[0].mxu0 %v1381
      %v1383 = vpop.f32.mrb[0].mxu0
      %v1384 = vadd.f32 %v1011, %v1383
      %v1385 = vpop.f32.mrb[0].mxu0
      %1386 = vmatprep.mubr.f32.mxu0 0.0
      %v1387 = vand.u32 %v794, 4294901760
      %1388 = vmatmul.mubr.f32.gmra.mrb[0].mxu0 %v1387
      %v1389 = vpop.f32.mrb[0].mxu0
      %v1390 = vadd.f32 %v1021, %v1389
      %v1391 = vpop.f32.mrb[0].mxu0
      %1392 = vmatprep.mubr.f32.mxu0 0.0
      %v1393 = vand.u32 %v797, 4294901760
      %1394 = vmatmul.mubr.f32.gmra.mrb[0].mxu0 %v1393
      %v1395 = vpop.f32.mrb[0].mxu0
      %v1396 = vadd.f32 %v1031, %v1395
      %v1397 = vpop.f32.mrb[0].mxu0
      %1398 = vmatprep.mubr.f32.mxu0 0.0
      %v1399 = vand.u32 %v800, 4294901760
      %1400 = vmatmul.mubr.f32.gmra.mrb[0].mxu0 %v1399
      %v1401 = vpop.f32.mrb[0].mxu0
      %v1402 = vadd.f32 %v1041, %v1401
      %v1403 = vpop.f32.mrb[0].mxu0
      %1404 = vmatprep.mubr.f32.mxu0 0.0
      %v1405 = vand.u32 %v803, 4294901760
      %1406 = vmatmul.mubr.f32.gmra.mrb[0].mxu0 %v1405
      %v1407 = vpop.f32.mrb[0].mxu0
      %v1408 = vadd.f32 %v1051, %v1407
      %v1409 = vpop.f32.mrb[0].mxu0
      %1410 = vmatprep.mubr.f32.mxu0 0.0
      %v1411 = vand.u32 %v806, 4294901760
      %1412 = vmatmul.mubr.f32.gmra.mrb[0].mxu0 %v1411
      %v1413 = vpop.f32.mrb[0].mxu0
      %v1414 = vadd.f32 %v1061, %v1413
      %v1415 = vpop.f32.mrb[0].mxu0
      %1416 = vmatprep.mubr.f32.mxu0 0.0
      %v1417 = vand.u32 %v809, 4294901760
      %1418 = vmatmul.mubr.f32.gmra.mrb[0].mxu0 %v1417
      %v1419 = vpop.f32.mrb[0].mxu0
      %v1420 = vadd.f32 %v1071, %v1419
      %v1421 = vpop.f32.mrb[0].mxu0
      %1422 = vmatprep.mubr.f32.mxu0 0.0
      %v1423 = vand.u32 %v812, 4294901760
      %1424 = vmatmul.mubr.f32.gmra.mrb[0].mxu0 %v1423
      %v1425 = vpop.f32.mrb[0].mxu0
      %v1426 = vadd.f32 %v1081, %v1425
      %v1427 = vpop.f32.mrb[0].mxu0
      %1428 = vmatprep.mubr.f32.mxu0 0.0
      %v1429 = vand.u32 %v815, 4294901760
      %1430 = vmatmul.mubr.f32.gmra.mrb[0].mxu0 %v1429
      %v1431 = vpop.f32.mrb[0].mxu0
      %v1432 = vadd.f32 %v1091, %v1431
      %v1433 = vpop.f32.mrb[0].mxu0
      %1434 = vmatprep.mubr.f32.mxu0 0.0
      %v1435 = vand.u32 %v818, 4294901760
      %1436 = vmatmul.mubr.f32.gmra.mrb[0].mxu0 %v1435
      %v1437 = vpop.f32.mrb[0].mxu0
      %v1438 = vadd.f32 %v1101, %v1437
      %v1439 = vpop.f32.mrb[0].mxu0
      %1440 = vmatprep.mubr.f32.mxu0 0.0
      %v1441 = vand.u32 %v821, 4294901760
      %1442 = vmatmul.mubr.f32.gmra.mrb[0].mxu0 %v1441
      %v1443 = vpop.f32.mrb[0].mxu0
      %v1444 = vadd.f32 %v1111, %v1443
      %v1445 = vpop.f32.mrb[0].mxu0
      %1446 = vmatprep.mubr.f32.mxu0 0.0
      %v1447 = vand.u32 %v824, 4294901760
      %1448 = vmatmul.mubr.f32.gmra.mrb[0].mxu0 %v1447
      %v1449 = vpop.f32.mrb[0].mxu0
      %v1450 = vadd.f32 %v1121, %v1449
      %v1451 = vpop.f32.mrb[0].mxu0
      %1452 = vmatprep.mubr.f32.mxu0 0.0
      %v1453 = vand.u32 %v827, 4294901760
      %1454 = vmatmul.mubr.f32.gmra.mrb[0].mxu0 %v1453
      %v1455 = vpop.f32.mrb[0].mxu0
      %v1456 = vadd.f32 %v1131, %v1455
      %v1457 = vpop.f32.mrb[0].mxu0
      %1458 = vmatprep.mubr.f32.mxu0 0.0
      %v1459 = vand.u32 %v830, 4294901760
      %1460 = vmatmul.mubr.f32.gmra.mrb[0].mxu0 %v1459
      %v1461 = vpop.f32.mrb[0].mxu0
      %v1462 = vadd.f32 %v1141, %v1461
      %v1463 = vpop.f32.mrb[0].mxu0
      %1464 = vmatprep.mubr.f32.mxu0 0.0
      %v1465 = vand.u32 %v833, 4294901760
      %1466 = vmatmul.mubr.f32.gmra.mrb[0].mxu0 %v1465
      %v1467 = vpop.f32.mrb[0].mxu0
      %v1468 = vadd.f32 %v1151, %v1467
      %v1469 = vpop.f32.mrb[0].mxu0
      %1470 = vmatprep.mubr.f32.mxu0 0.0
      %v1471 = vand.u32 %v836, 4294901760
      %1472 = vmatmul.mubr.f32.gmra.mrb[0].mxu0 %v1471
      %v1473 = vpop.f32.mrb[0].mxu0
      %v1474 = vadd.f32 %v1161, %v1473
      %v1475 = vpop.f32.mrb[0].mxu0
      %1476 = vmatprep.mubr.f32.mxu0 0.0
      %v1477 = vand.u32 %v839, 4294901760
      %1478 = vmatmul.mubr.f32.gmra.mrb[0].mxu0 %v1477
      %v1479 = vpop.f32.mrb[0].mxu0
      %v1480 = vadd.f32 %v1171, %v1479
      %v1481 = vpop.f32.mrb[0].mxu0
      %1482 = vmatprep.mubr.f32.mxu0 0.0
      %v1483 = vand.u32 %v842, 4294901760
      %1484 = vmatmul.mubr.f32.gmra.mrb[0].mxu0 %v1483
      %v1485 = vpop.f32.mrb[0].mxu0
      %v1486 = vadd.f32 %v1181, %v1485
      %v1487 = vpop.f32.mrb[0].mxu0
      %1488 = vmatprep.mubr.f32.mxu0 0.0
      %v1489 = vand.u32 %v845, 4294901760
      %1490 = vmatmul.mubr.f32.gmra.mrb[0].mxu0 %v1489
      %v1491 = vpop.f32.mrb[0].mxu0
      %v1492 = vadd.f32 %v1191, %v1491
      %v1493 = vpop.f32.mrb[0].mxu0
      %1494 = vmatprep.mubr.f32.mxu0 0.0
      %v1495 = vand.u32 %v848, 4294901760
      %1496 = vmatmul.mubr.f32.gmra.mrb[0].mxu0 %v1495
      %v1497 = vpop.f32.mrb[0].mxu0
      %v1498 = vadd.f32 %v1201, %v1497
      %v1499 = vpop.f32.mrb[0].mxu0
      %1500 = vmatprep.mubr.f32.mxu0 0.0
      %v1501 = vand.u32 %v851, 4294901760
      %1502 = vmatmul.mubr.f32.gmra.mrb[0].mxu0 %v1501
      %v1503 = vpop.f32.mrb[0].mxu0
      %v1504 = vadd.f32 %v1211, %v1503
      %v1505 = vpop.f32.mrb[0].mxu0
      %1506 = vmatprep.mubr.f32.mxu0 0.0
      %v1507 = vand.u32 %v854, 4294901760
      %1508 = vmatmul.mubr.f32.gmra.mrb[0].mxu0 %v1507
      %v1509 = vpop.f32.mrb[0].mxu0
      %v1510 = vadd.f32 %v1221, %v1509
      %v1511 = vpop.f32.mrb[0].mxu0
      %1512 = vmatprep.mubr.f32.mxu0 0.0
      %v1513 = vand.u32 %v857, 4294901760
      %1514 = vmatmul.mubr.f32.gmra.mrb[0].mxu0 %v1513
      %v1515 = vpop.f32.mrb[0].mxu0
      %v1516 = vadd.f32 %v1231, %v1515
      %v1517 = vpop.f32.mrb[0].mxu0
      %1518 = vmatprep.mubr.f32.mxu0 0.0
      %v1519 = vand.u32 %v860, 4294901760
      %1520 = vmatmul.mubr.f32.gmra.mrb[0].mxu0 %v1519
      %v1521 = vpop.f32.mrb[0].mxu0
      %v1522 = vadd.f32 %v1241, %v1521
      %v1523 = vpop.f32.mrb[0].mxu0
      %1524 = vmatprep.mubr.f32.mxu0 0.0
      %v1525 = vand.u32 %v863, 4294901760
      %1526 = vmatmul.mubr.f32.gmra.mrb[0].mxu0 %v1525
      %v1527 = vpop.f32.mrb[0].mxu0
      %v1528 = vadd.f32 %v1251, %v1527
      %v1529 = vpop.f32.mrb[0].mxu0
      %1530 = vdwg.mxu0
      %1531 = vmatprep.subr.mxu0 0.0
      %v1532 = vand.u32 %v765, 4294901760
      %v1533 = vsub.f32 %v765, %v1532
      %1534 = vmatpush1.msra.mxu0 %v1533
      %1535 = vmatprep.subr.mxu0 0.0
      %v1536 = vand.u32 %v766, 4294901760
      %v1537 = vsub.f32 %v766, %v1536
      %1538 = vmatpush1.msra.mxu0 %v1537
      %1539 = vmatprep.subr.mxu0 0.0
      %v1540 = vand.u32 %v767, 4294901760
      %v1541 = vsub.f32 %v767, %v1540
      %1542 = vmatpush1.msra.mxu0 %v1541
      %1543 = vmatprep.subr.mxu0 0.0
      %v1544 = vand.u32 %v768, 4294901760
      %v1545 = vsub.f32 %v768, %v1544
      %1546 = vmatpush1.msra.mxu0 %v1545
      %1547 = vmatprep.subr.mxu0 0.0
      %1548 = vmatpush1.msra.mxu0 0.0
      %1549 = vmatprep.subr.mxu0 0.0
      %1550 = vmatpush1.msra.mxu0 0.0
      %1551 = vmatprep.subr.mxu0 0.0
      %1552 = vmatpush1.msra.mxu0 0.0
      %1553 = vmatprep.subr.mxu0 0.0
      %1554 = vmatpush1.msra.mxu0 0.0
      %1555 = vmatprep.subr.mxu0 0.0
      %1556 = vmatpush1.msra.mxu0 0.0
      %1557 = vmatprep.subr.mxu0 0.0
      %1558 = vmatpush1.msra.mxu0 0.0
      %1559 = vmatprep.subr.mxu0 0.0
      %1560 = vmatpush1.msra.mxu0 0.0
      %1561 = vmatprep.subr.mxu0 0.0
      %1562 = vmatpush1.msra.mxu0 0.0
      %1563 = vmatprep.subr.mxu0 0.0
      %1564 = vmatpush1.msra.mxu0 0.0
      %1565 = vmatprep.subr.mxu0 0.0
      %1566 = vmatpush1.msra.mxu0 0.0
      %1567 = vmatprep.subr.mxu0 0.0
      %1568 = vmatpush1.msra.mxu0 0.0
      %1569 = vmatprep.subr.mxu0 0.0
      %1570 = vmatpush1.msra.mxu0 0.0
      %1571 = vmatprep.subr.mxu0 0.0
      %1572 = vmatpush1.msra.mxu0 0.0
      %1573 = vmatprep.subr.mxu0 0.0
      %1574 = vmatpush1.msra.mxu0 0.0
      %1575 = vmatprep.subr.mxu0 0.0
      %1576 = vmatpush1.msra.mxu0 0.0
      %1577 = vmatprep.subr.mxu0 0.0
      %1578 = vmatpush1.msra.mxu0 0.0
      %1579 = vmatprep.subr.mxu0 0.0
      %1580 = vmatpush1.msra.mxu0 0.0
      %1581 = vmatprep.subr.mxu0 0.0
      %1582 = vmatpush1.msra.mxu0 0.0
      %1583 = vmatprep.subr.mxu0 0.0
      %1584 = vmatpush1.msra.mxu0 0.0
      %1585 = vmatprep.subr.mxu0 0.0
      %1586 = vmatpush1.msra.mxu0 0.0
      %1587 = vmatprep.subr.mxu0 0.0
      %1588 = vmatpush1.msra.mxu0 0.0
      %1589 = vmatprep.subr.mxu0 0.0
      %1590 = vmatpush1.msra.mxu0 0.0
      %1591 = vmatprep.subr.mxu0 0.0
      %1592 = vmatpush1.msra.mxu0 0.0
      %1593 = vmatprep.subr.mxu0 0.0
      %1594 = vmatpush1.msra.mxu0 0.0
      %1595 = vmatprep.subr.mxu0 0.0
      %1596 = vmatpush1.msra.mxu0 0.0
      %1597 = vmatprep.subr.mxu0 0.0
      %1598 = vmatpush1.msra.mxu0 0.0
      %1599 = vmatprep.subr.mxu0 0.0
      %1600 = vmatpush1.msra.mxu0 0.0
      %1601 = vmatprep.subr.mxu0 0.0
      %1602 = vmatpush1.msra.mxu0 0.0
      %1603 = vmatprep.mubr.f32.mxu0 0.0
      %v1604 = vand.u32 %v770, 4294901760
      %v1605 = vsub.f32 %v770, %v1604
      %1606 = vmatmul.mubr.f32.gmra.mrb[0].mxu0 %v1605
      %v1607 = vpop.f32.mrb[0].mxu0
      %v1608 = vadd.f32 %v1342, %v1607
      %v1609 = vpop.f32.mrb[0].mxu0
      %1610 = vmatprep.mubr.f32.mxu0 0.0
      %v1611 = vand.u32 %v773, 4294901760
      %v1612 = vsub.f32 %v773, %v1611
      %1613 = vmatmul.mubr.f32.gmra.mrb[0].mxu0 %v1612
      %v1614 = vpop.f32.mrb[0].mxu0
      %v1615 = vadd.f32 %v1348, %v1614
      %v1616 = vpop.f32.mrb[0].mxu0
      %1617 = vmatprep.mubr.f32.mxu0 0.0
      %v1618 = vand.u32 %v776, 4294901760
      %v1619 = vsub.f32 %v776, %v1618
      %1620 = vmatmul.mubr.f32.gmra.mrb[0].mxu0 %v1619
      %v1621 = vpop.f32.mrb[0].mxu0
      %v1622 = vadd.f32 %v1354, %v1621
      %v1623 = vpop.f32.mrb[0].mxu0
      %1624 = vmatprep.mubr.f32.mxu0 0.0
      %v1625 = vand.u32 %v779, 4294901760
      %v1626 = vsub.f32 %v779, %v1625
      %1627 = vmatmul.mubr.f32.gmra.mrb[0].mxu0 %v1626
      %v1628 = vpop.f32.mrb[0].mxu0
      %v1629 = vadd.f32 %v1360, %v1628
      %v1630 = vpop.f32.mrb[0].mxu0
      %1631 = vmatprep.mubr.f32.mxu0 0.0
      %v1632 = vand.u32 %v782, 4294901760
      %v1633 = vsub.f32 %v782, %v1632
      %1634 = vmatmul.mubr.f32.gmra.mrb[0].mxu0 %v1633
      %v1635 = vpop.f32.mrb[0].mxu0
      %v1636 = vadd.f32 %v1366, %v1635
      %v1637 = vpop.f32.mrb[0].mxu0
      %1638 = vmatprep.mubr.f32.mxu0 0.0
      %v1639 = vand.u32 %v785, 4294901760
      %v1640 = vsub.f32 %v785, %v1639
      %1641 = vmatmul.mubr.f32.gmra.mrb[0].mxu0 %v1640
      %v1642 = vpop.f32.mrb[0].mxu0
      %v1643 = vadd.f32 %v1372, %v1642
      %v1644 = vpop.f32.mrb[0].mxu0
      %1645 = vmatprep.mubr.f32.mxu0 0.0
      %v1646 = vand.u32 %v788, 4294901760
      %v1647 = vsub.f32 %v788, %v1646
      %1648 = vmatmul.mubr.f32.gmra.mrb[0].mxu0 %v1647
      %v1649 = vpop.f32.mrb[0].mxu0
      %v1650 = vadd.f32 %v1378, %v1649
      %v1651 = vpop.f32.mrb[0].mxu0
      %1652 = vmatprep.mubr.f32.mxu0 0.0
      %v1653 = vand.u32 %v791, 4294901760
      %v1654 = vsub.f32 %v791, %v1653
      %1655 = vmatmul.mubr.f32.gmra.mrb[0].mxu0 %v1654
      %v1656 = vpop.f32.mrb[0].mxu0
      %v1657 = vadd.f32 %v1384, %v1656
      %v1658 = vpop.f32.mrb[0].mxu0
      %1659 = vmatprep.mubr.f32.mxu0 0.0
      %v1660 = vand.u32 %v794, 4294901760
      %v1661 = vsub.f32 %v794, %v1660
      %1662 = vmatmul.mubr.f32.gmra.mrb[0].mxu0 %v1661
      %v1663 = vpop.f32.mrb[0].mxu0
      %v1664 = vadd.f32 %v1390, %v1663
      %v1665 = vpop.f32.mrb[0].mxu0
      %1666 = vmatprep.mubr.f32.mxu0 0.0
      %v1667 = vand.u32 %v797, 4294901760
      %v1668 = vsub.f32 %v797, %v1667
      %1669 = vmatmul.mubr.f32.gmra.mrb[0].mxu0 %v1668
      %v1670 = vpop.f32.mrb[0].mxu0
      %v1671 = vadd.f32 %v1396, %v1670
      %v1672 = vpop.f32.mrb[0].mxu0
      %1673 = vmatprep.mubr.f32.mxu0 0.0
      %v1674 = vand.u32 %v800, 4294901760
      %v1675 = vsub.f32 %v800, %v1674
      %1676 = vmatmul.mubr.f32.gmra.mrb[0].mxu0 %v1675
      %v1677 = vpop.f32.mrb[0].mxu0
      %v1678 = vadd.f32 %v1402, %v1677
      %v1679 = vpop.f32.mrb[0].mxu0
      %1680 = vmatprep.mubr.f32.mxu0 0.0
      %v1681 = vand.u32 %v803, 4294901760
      %v1682 = vsub.f32 %v803, %v1681
      %1683 = vmatmul.mubr.f32.gmra.mrb[0].mxu0 %v1682
      %v1684 = vpop.f32.mrb[0].mxu0
      %v1685 = vadd.f32 %v1408, %v1684
      %v1686 = vpop.f32.mrb[0].mxu0
      %1687 = vmatprep.mubr.f32.mxu0 0.0
      %v1688 = vand.u32 %v806, 4294901760
      %v1689 = vsub.f32 %v806, %v1688
      %1690 = vmatmul.mubr.f32.gmra.mrb[0].mxu0 %v1689
      %v1691 = vpop.f32.mrb[0].mxu0
      %v1692 = vadd.f32 %v1414, %v1691
      %v1693 = vpop.f32.mrb[0].mxu0
      %1694 = vmatprep.mubr.f32.mxu0 0.0
      %v1695 = vand.u32 %v809, 4294901760
      %v1696 = vsub.f32 %v809, %v1695
      %1697 = vmatmul.mubr.f32.gmra.mrb[0].mxu0 %v1696
      %v1698 = vpop.f32.mrb[0].mxu0
      %v1699 = vadd.f32 %v1420, %v1698
      %v1700 = vpop.f32.mrb[0].mxu0
      %1701 = vmatprep.mubr.f32.mxu0 0.0
      %v1702 = vand.u32 %v812, 4294901760
      %v1703 = vsub.f32 %v812, %v1702
      %1704 = vmatmul.mubr.f32.gmra.mrb[0].mxu0 %v1703
      %v1705 = vpop.f32.mrb[0].mxu0
      %v1706 = vadd.f32 %v1426, %v1705
      %v1707 = vpop.f32.mrb[0].mxu0
      %1708 = vmatprep.mubr.f32.mxu0 0.0
      %v1709 = vand.u32 %v815, 4294901760
      %v1710 = vsub.f32 %v815, %v1709
      %1711 = vmatmul.mubr.f32.gmra.mrb[0].mxu0 %v1710
      %v1712 = vpop.f32.mrb[0].mxu0
      %v1713 = vadd.f32 %v1432, %v1712
      %v1714 = vpop.f32.mrb[0].mxu0
      %1715 = vmatprep.mubr.f32.mxu0 0.0
      %v1716 = vand.u32 %v818, 4294901760
      %v1717 = vsub.f32 %v818, %v1716
      %1718 = vmatmul.mubr.f32.gmra.mrb[0].mxu0 %v1717
      %v1719 = vpop.f32.mrb[0].mxu0
      %v1720 = vadd.f32 %v1438, %v1719
      %v1721 = vpop.f32.mrb[0].mxu0
      %1722 = vmatprep.mubr.f32.mxu0 0.0
      %v1723 = vand.u32 %v821, 4294901760
      %v1724 = vsub.f32 %v821, %v1723
      %1725 = vmatmul.mubr.f32.gmra.mrb[0].mxu0 %v1724
      %v1726 = vpop.f32.mrb[0].mxu0
      %v1727 = vadd.f32 %v1444, %v1726
      %v1728 = vpop.f32.mrb[0].mxu0
      %1729 = vmatprep.mubr.f32.mxu0 0.0
      %v1730 = vand.u32 %v824, 4294901760
      %v1731 = vsub.f32 %v824, %v1730
      %1732 = vmatmul.mubr.f32.gmra.mrb[0].mxu0 %v1731
      %v1733 = vpop.f32.mrb[0].mxu0
      %v1734 = vadd.f32 %v1450, %v1733
      %v1735 = vpop.f32.mrb[0].mxu0
      %1736 = vmatprep.mubr.f32.mxu0 0.0
      %v1737 = vand.u32 %v827, 4294901760
      %v1738 = vsub.f32 %v827, %v1737
      %1739 = vmatmul.mubr.f32.gmra.mrb[0].mxu0 %v1738
      %v1740 = vpop.f32.mrb[0].mxu0
      %v1741 = vadd.f32 %v1456, %v1740
      %v1742 = vpop.f32.mrb[0].mxu0
      %1743 = vmatprep.mubr.f32.mxu0 0.0
      %v1744 = vand.u32 %v830, 4294901760
      %v1745 = vsub.f32 %v830, %v1744
      %1746 = vmatmul.mubr.f32.gmra.mrb[0].mxu0 %v1745
      %v1747 = vpop.f32.mrb[0].mxu0
      %v1748 = vadd.f32 %v1462, %v1747
      %v1749 = vpop.f32.mrb[0].mxu0
      %1750 = vmatprep.mubr.f32.mxu0 0.0
      %v1751 = vand.u32 %v833, 4294901760
      %v1752 = vsub.f32 %v833, %v1751
      %1753 = vmatmul.mubr.f32.gmra.mrb[0].mxu0 %v1752
      %v1754 = vpop.f32.mrb[0].mxu0
      %v1755 = vadd.f32 %v1468, %v1754
      %v1756 = vpop.f32.mrb[0].mxu0
      %1757 = vmatprep.mubr.f32.mxu0 0.0
      %v1758 = vand.u32 %v836, 4294901760
      %v1759 = vsub.f32 %v836, %v1758
      %1760 = vmatmul.mubr.f32.gmra.mrb[0].mxu0 %v1759
      %v1761 = vpop.f32.mrb[0].mxu0
      %v1762 = vadd.f32 %v1474, %v1761
      %v1763 = vpop.f32.mrb[0].mxu0
      %1764 = vmatprep.mubr.f32.mxu0 0.0
      %v1765 = vand.u32 %v839, 4294901760
      %v1766 = vsub.f32 %v839, %v1765
      %1767 = vmatmul.mubr.f32.gmra.mrb[0].mxu0 %v1766
      %v1768 = vpop.f32.mrb[0].mxu0
      %v1769 = vadd.f32 %v1480, %v1768
      %v1770 = vpop.f32.mrb[0].mxu0
      %1771 = vmatprep.mubr.f32.mxu0 0.0
      %v1772 = vand.u32 %v842, 4294901760
      %v1773 = vsub.f32 %v842, %v1772
      %1774 = vmatmul.mubr.f32.gmra.mrb[0].mxu0 %v1773
      %v1775 = vpop.f32.mrb[0].mxu0
      %v1776 = vadd.f32 %v1486, %v1775
      %v1777 = vpop.f32.mrb[0].mxu0
      %1778 = vmatprep.mubr.f32.mxu0 0.0
      %v1779 = vand.u32 %v845, 4294901760
      %v1780 = vsub.f32 %v845, %v1779
      %1781 = vmatmul.mubr.f32.gmra.mrb[0].mxu0 %v1780
      %v1782 = vpop.f32.mrb[0].mxu0
      %v1783 = vadd.f32 %v1492, %v1782
      %v1784 = vpop.f32.mrb[0].mxu0
      %1785 = vmatprep.mubr.f32.mxu0 0.0
      %v1786 = vand.u32 %v848, 4294901760
      %v1787 = vsub.f32 %v848, %v1786
      %1788 = vmatmul.mubr.f32.gmra.mrb[0].mxu0 %v1787
      %v1789 = vpop.f32.mrb[0].mxu0
      %v1790 = vadd.f32 %v1498, %v1789
      %v1791 = vpop.f32.mrb[0].mxu0
      %1792 = vmatprep.mubr.f32.mxu0 0.0
      %v1793 = vand.u32 %v851, 4294901760
      %v1794 = vsub.f32 %v851, %v1793
      %1795 = vmatmul.mubr.f32.gmra.mrb[0].mxu0 %v1794
      %v1796 = vpop.f32.mrb[0].mxu0
      %v1797 = vadd.f32 %v1504, %v1796
      %v1798 = vpop.f32.mrb[0].mxu0
      %1799 = vmatprep.mubr.f32.mxu0 0.0
      %v1800 = vand.u32 %v854, 4294901760
      %v1801 = vsub.f32 %v854, %v1800
      %1802 = vmatmul.mubr.f32.gmra.mrb[0].mxu0 %v1801
      %v1803 = vpop.f32.mrb[0].mxu0
      %v1804 = vadd.f32 %v1510, %v1803
      %v1805 = vpop.f32.mrb[0].mxu0
      %1806 = vmatprep.mubr.f32.mxu0 0.0
      %v1807 = vand.u32 %v857, 4294901760
      %v1808 = vsub.f32 %v857, %v1807
      %1809 = vmatmul.mubr.f32.gmra.mrb[0].mxu0 %v1808
      %v1810 = vpop.f32.mrb[0].mxu0
      %v1811 = vadd.f32 %v1516, %v1810
      %v1812 = vpop.f32.mrb[0].mxu0
      %1813 = vmatprep.mubr.f32.mxu0 0.0
      %v1814 = vand.u32 %v860, 4294901760
      %v1815 = vsub.f32 %v860, %v1814
      %1816 = vmatmul.mubr.f32.gmra.mrb[0].mxu0 %v1815
      %v1817 = vpop.f32.mrb[0].mxu0
      %v1818 = vadd.f32 %v1522, %v1817
      %v1819 = vpop.f32.mrb[0].mxu0
      %1820 = vmatprep.mubr.f32.mxu0 0.0
      %v1821 = vand.u32 %v863, 4294901760
      %v1822 = vsub.f32 %v863, %v1821
      %1823 = vmatmul.mubr.f32.gmra.mrb[0].mxu0 %v1822
      %v1824 = vpop.f32.mrb[0].mxu0
      %v1825 = vadd.f32 %v1528, %v1824
      %v1826 = vpop.f32.mrb[0].mxu0
      %1827 = vdwg.mxu0
      %1828 = vmatprep.subr.mxu0 0.0
      %v1829 = vand.u32 %v765, 4294901760
      %1830 = vmatpush1.msra.mxu0 %v1829
      %1831 = vmatprep.subr.mxu0 0.0
      %v1832 = vand.u32 %v766, 4294901760
      %1833 = vmatpush1.msra.mxu0 %v1832
      %1834 = vmatprep.subr.mxu0 0.0
      %v1835 = vand.u32 %v767, 4294901760
      %1836 = vmatpush1.msra.mxu0 %v1835
      %1837 = vmatprep.subr.mxu0 0.0
      %v1838 = vand.u32 %v768, 4294901760
      %1839 = vmatpush1.msra.mxu0 %v1838
      %1840 = vmatprep.subr.mxu0 0.0
      %1841 = vmatpush1.msra.mxu0 0.0
      %1842 = vmatprep.subr.mxu0 0.0
      %1843 = vmatpush1.msra.mxu0 0.0
      %1844 = vmatprep.subr.mxu0 0.0
      %1845 = vmatpush1.msra.mxu0 0.0
      %1846 = vmatprep.subr.mxu0 0.0
      %1847 = vmatpush1.msra.mxu0 0.0
      %1848 = vmatprep.subr.mxu0 0.0
      %1849 = vmatpush1.msra.mxu0 0.0
      %1850 = vmatprep.subr.mxu0 0.0
      %1851 = vmatpush1.msra.mxu0 0.0
      %1852 = vmatprep.subr.mxu0 0.0
      %1853 = vmatpush1.msra.mxu0 0.0
      %1854 = vmatprep.subr.mxu0 0.0
      %1855 = vmatpush1.msra.mxu0 0.0
      %1856 = vmatprep.subr.mxu0 0.0
      %1857 = vmatpush1.msra.mxu0 0.0
      %1858 = vmatprep.subr.mxu0 0.0
      %1859 = vmatpush1.msra.mxu0 0.0
      %1860 = vmatprep.subr.mxu0 0.0
      %1861 = vmatpush1.msra.mxu0 0.0
      %1862 = vmatprep.subr.mxu0 0.0
      %1863 = vmatpush1.msra.mxu0 0.0
      %1864 = vmatprep.subr.mxu0 0.0
      %1865 = vmatpush1.msra.mxu0 0.0
      %1866 = vmatprep.subr.mxu0 0.0
      %1867 = vmatpush1.msra.mxu0 0.0
      %1868 = vmatprep.subr.mxu0 0.0
      %1869 = vmatpush1.msra.mxu0 0.0
      %1870 = vmatprep.subr.mxu0 0.0
      %1871 = vmatpush1.msra.mxu0 0.0
      %1872 = vmatprep.subr.mxu0 0.0
      %1873 = vmatpush1.msra.mxu0 0.0
      %1874 = vmatprep.subr.mxu0 0.0
      %1875 = vmatpush1.msra.mxu0 0.0
      %1876 = vmatprep.subr.mxu0 0.0
      %1877 = vmatpush1.msra.mxu0 0.0
      %1878 = vmatprep.subr.mxu0 0.0
      %1879 = vmatpush1.msra.mxu0 0.0
      %1880 = vmatprep.subr.mxu0 0.0
      %1881 = vmatpush1.msra.mxu0 0.0
      %1882 = vmatprep.subr.mxu0 0.0
      %1883 = vmatpush1.msra.mxu0 0.0
      %1884 = vmatprep.subr.mxu0 0.0
      %1885 = vmatpush1.msra.mxu0 0.0
      %1886 = vmatprep.subr.mxu0 0.0
      %1887 = vmatpush1.msra.mxu0 0.0
      %1888 = vmatprep.subr.mxu0 0.0
      %1889 = vmatpush1.msra.mxu0 0.0
      %1890 = vmatprep.subr.mxu0 0.0
      %1891 = vmatpush1.msra.mxu0 0.0
      %1892 = vmatprep.subr.mxu0 0.0
      %1893 = vmatpush1.msra.mxu0 0.0
      %1894 = vmatprep.subr.mxu0 0.0
      %1895 = vmatpush1.msra.mxu0 0.0
      %1896 = vmatprep.mubr.f32.mxu0 0.0
      %v1897 = vand.u32 %v770, 4294901760
      %v1898 = vsub.f32 %v770, %v1897
      %v1899 = vand.u32 %v1898, 4294901760
      %1900 = vmatmul.mubr.f32.gmra.mrb[0].mxu0 %v1899
      %v1901 = vpop.f32.mrb[0].mxu0
      %v1902 = vadd.f32 %v1608, %v1901
      %v1903 = vpop.f32.mrb[0].mxu0
      %1904 = vmatprep.mubr.f32.mxu0 0.0
      %v1905 = vand.u32 %v773, 4294901760
      %v1906 = vsub.f32 %v773, %v1905
      %v1907 = vand.u32 %v1906, 4294901760
      %1908 = vmatmul.mubr.f32.gmra.mrb[0].mxu0 %v1907
      %v1909 = vpop.f32.mrb[0].mxu0
      %v1910 = vadd.f32 %v1615, %v1909
      %v1911 = vpop.f32.mrb[0].mxu0
      %1912 = vmatprep.mubr.f32.mxu0 0.0
      %v1913 = vand.u32 %v776, 4294901760
      %v1914 = vsub.f32 %v776, %v1913
      %v1915 = vand.u32 %v1914, 4294901760
      %1916 = vmatmul.mubr.f32.gmra.mrb[0].mxu0 %v1915
      %v1917 = vpop.f32.mrb[0].mxu0
      %v1918 = vadd.f32 %v1622, %v1917
      %v1919 = vpop.f32.mrb[0].mxu0
      %1920 = vmatprep.mubr.f32.mxu0 0.0
      %v1921 = vand.u32 %v779, 4294901760
      %v1922 = vsub.f32 %v779, %v1921
      %v1923 = vand.u32 %v1922, 4294901760
      %1924 = vmatmul.mubr.f32.gmra.mrb[0].mxu0 %v1923
      %v1925 = vpop.f32.mrb[0].mxu0
      %v1926 = vadd.f32 %v1629, %v1925
      %v1927 = vpop.f32.mrb[0].mxu0
      %1928 = vmatprep.mubr.f32.mxu0 0.0
      %v1929 = vand.u32 %v782, 4294901760
      %v1930 = vsub.f32 %v782, %v1929
      %v1931 = vand.u32 %v1930, 4294901760
      %1932 = vmatmul.mubr.f32.gmra.mrb[0].mxu0 %v1931
      %v1933 = vpop.f32.mrb[0].mxu0
      %v1934 = vadd.f32 %v1636, %v1933
      %v1935 = vpop.f32.mrb[0].mxu0
      %1936 = vmatprep.mubr.f32.mxu0 0.0
      %v1937 = vand.u32 %v785, 4294901760
      %v1938 = vsub.f32 %v785, %v1937
      %v1939 = vand.u32 %v1938, 4294901760
      %1940 = vmatmul.mubr.f32.gmra.mrb[0].mxu0 %v1939
      %v1941 = vpop.f32.mrb[0].mxu0
      %v1942 = vadd.f32 %v1643, %v1941
      %v1943 = vpop.f32.mrb[0].mxu0
      %1944 = vmatprep.mubr.f32.mxu0 0.0
      %v1945 = vand.u32 %v788, 4294901760
      %v1946 = vsub.f32 %v788, %v1945
      %v1947 = vand.u32 %v1946, 4294901760
      %1948 = vmatmul.mubr.f32.gmra.mrb[0].mxu0 %v1947
      %v1949 = vpop.f32.mrb[0].mxu0
      %v1950 = vadd.f32 %v1650, %v1949
      %v1951 = vpop.f32.mrb[0].mxu0
      %1952 = vmatprep.mubr.f32.mxu0 0.0
      %v1953 = vand.u32 %v791, 4294901760
      %v1954 = vsub.f32 %v791, %v1953
      %v1955 = vand.u32 %v1954, 4294901760
      %1956 = vmatmul.mubr.f32.gmra.mrb[0].mxu0 %v1955
      %v1957 = vpop.f32.mrb[0].mxu0
      %v1958 = vadd.f32 %v1657, %v1957
      %v1959 = vpop.f32.mrb[0].mxu0
      %1960 = vmatprep.mubr.f32.mxu0 0.0
      %v1961 = vand.u32 %v794, 4294901760
      %v1962 = vsub.f32 %v794, %v1961
      %v1963 = vand.u32 %v1962, 4294901760
      %1964 = vmatmul.mubr.f32.gmra.mrb[0].mxu0 %v1963
      %v1965 = vpop.f32.mrb[0].mxu0
      %v1966 = vadd.f32 %v1664, %v1965
      %v1967 = vpop.f32.mrb[0].mxu0
      %1968 = vmatprep.mubr.f32.mxu0 0.0
      %v1969 = vand.u32 %v797, 4294901760
      %v1970 = vsub.f32 %v797, %v1969
      %v1971 = vand.u32 %v1970, 4294901760
      %1972 = vmatmul.mubr.f32.gmra.mrb[0].mxu0 %v1971
      %v1973 = vpop.f32.mrb[0].mxu0
      %v1974 = vadd.f32 %v1671, %v1973
      %v1975 = vpop.f32.mrb[0].mxu0
      %1976 = vmatprep.mubr.f32.mxu0 0.0
      %v1977 = vand.u32 %v800, 4294901760
      %v1978 = vsub.f32 %v800, %v1977
      %v1979 = vand.u32 %v1978, 4294901760
      %1980 = vmatmul.mubr.f32.gmra.mrb[0].mxu0 %v1979
      %v1981 = vpop.f32.mrb[0].mxu0
      %v1982 = vadd.f32 %v1678, %v1981
      %v1983 = vpop.f32.mrb[0].mxu0
      %1984 = vmatprep.mubr.f32.mxu0 0.0
      %v1985 = vand.u32 %v803, 4294901760
      %v1986 = vsub.f32 %v803, %v1985
      %v1987 = vand.u32 %v1986, 4294901760
      %1988 = vmatmul.mubr.f32.gmra.mrb[0].mxu0 %v1987
      %v1989 = vpop.f32.mrb[0].mxu0
      %v1990 = vadd.f32 %v1685, %v1989
      %v1991 = vpop.f32.mrb[0].mxu0
      %1992 = vmatprep.mubr.f32.mxu0 0.0
      %v1993 = vand.u32 %v806, 4294901760
      %v1994 = vsub.f32 %v806, %v1993
      %v1995 = vand.u32 %v1994, 4294901760
      %1996 = vmatmul.mubr.f32.gmra.mrb[0].mxu0 %v1995
      %v1997 = vpop.f32.mrb[0].mxu0
      %v1998 = vadd.f32 %v1692, %v1997
      %v1999 = vpop.f32.mrb[0].mxu0
      %2000 = vmatprep.mubr.f32.mxu0 0.0
      %v2001 = vand.u32 %v809, 4294901760
      %v2002 = vsub.f32 %v809, %v2001
      %v2003 = vand.u32 %v2002, 4294901760
      %2004 = vmatmul.mubr.f32.gmra.mrb[0].mxu0 %v2003
      %v2005 = vpop.f32.mrb[0].mxu0
      %v2006 = vadd.f32 %v1699, %v2005
      %v2007 = vpop.f32.mrb[0].mxu0
      %2008 = vmatprep.mubr.f32.mxu0 0.0
      %v2009 = vand.u32 %v812, 4294901760
      %v2010 = vsub.f32 %v812, %v2009
      %v2011 = vand.u32 %v2010, 4294901760
      %2012 = vmatmul.mubr.f32.gmra.mrb[0].mxu0 %v2011
      %v2013 = vpop.f32.mrb[0].mxu0
      %v2014 = vadd.f32 %v1706, %v2013
      %v2015 = vpop.f32.mrb[0].mxu0
      %2016 = vmatprep.mubr.f32.mxu0 0.0
      %v2017 = vand.u32 %v815, 4294901760
      %v2018 = vsub.f32 %v815, %v2017
      %v2019 = vand.u32 %v2018, 4294901760
      %2020 = vmatmul.mubr.f32.gmra.mrb[0].mxu0 %v2019
      %v2021 = vpop.f32.mrb[0].mxu0
      %v2022 = vadd.f32 %v1713, %v2021
      %v2023 = vpop.f32.mrb[0].mxu0
      %2024 = vmatprep.mubr.f32.mxu0 0.0
      %v2025 = vand.u32 %v818, 4294901760
      %v2026 = vsub.f32 %v818, %v2025
      %v2027 = vand.u32 %v2026, 4294901760
      %2028 = vmatmul.mubr.f32.gmra.mrb[0].mxu0 %v2027
      %v2029 = vpop.f32.mrb[0].mxu0
      %v2030 = vadd.f32 %v1720, %v2029
      %v2031 = vpop.f32.mrb[0].mxu0
      %2032 = vmatprep.mubr.f32.mxu0 0.0
      %v2033 = vand.u32 %v821, 4294901760
      %v2034 = vsub.f32 %v821, %v2033
      %v2035 = vand.u32 %v2034, 4294901760
      %2036 = vmatmul.mubr.f32.gmra.mrb[0].mxu0 %v2035
      %v2037 = vpop.f32.mrb[0].mxu0
      %v2038 = vadd.f32 %v1727, %v2037
      %v2039 = vpop.f32.mrb[0].mxu0
      %2040 = vmatprep.mubr.f32.mxu0 0.0
      %v2041 = vand.u32 %v824, 4294901760
      %v2042 = vsub.f32 %v824, %v2041
      %v2043 = vand.u32 %v2042, 4294901760
      %2044 = vmatmul.mubr.f32.gmra.mrb[0].mxu0 %v2043
      %v2045 = vpop.f32.mrb[0].mxu0
      %v2046 = vadd.f32 %v1734, %v2045
      %v2047 = vpop.f32.mrb[0].mxu0
      %2048 = vmatprep.mubr.f32.mxu0 0.0
      %v2049 = vand.u32 %v827, 4294901760
      %v2050 = vsub.f32 %v827, %v2049
      %v2051 = vand.u32 %v2050, 4294901760
      %2052 = vmatmul.mubr.f32.gmra.mrb[0].mxu0 %v2051
      %v2053 = vpop.f32.mrb[0].mxu0
      %v2054 = vadd.f32 %v1741, %v2053
      %v2055 = vpop.f32.mrb[0].mxu0
      %2056 = vmatprep.mubr.f32.mxu0 0.0
      %v2057 = vand.u32 %v830, 4294901760
      %v2058 = vsub.f32 %v830, %v2057
      %v2059 = vand.u32 %v2058, 4294901760
      %2060 = vmatmul.mubr.f32.gmra.mrb[0].mxu0 %v2059
      %v2061 = vpop.f32.mrb[0].mxu0
      %v2062 = vadd.f32 %v1748, %v2061
      %v2063 = vpop.f32.mrb[0].mxu0
      %2064 = vmatprep.mubr.f32.mxu0 0.0
      %v2065 = vand.u32 %v833, 4294901760
      %v2066 = vsub.f32 %v833, %v2065
      %v2067 = vand.u32 %v2066, 4294901760
      %2068 = vmatmul.mubr.f32.gmra.mrb[0].mxu0 %v2067
      %v2069 = vpop.f32.mrb[0].mxu0
      %v2070 = vadd.f32 %v1755, %v2069
      %v2071 = vpop.f32.mrb[0].mxu0
      %2072 = vmatprep.mubr.f32.mxu0 0.0
      %v2073 = vand.u32 %v836, 4294901760
      %v2074 = vsub.f32 %v836, %v2073
      %v2075 = vand.u32 %v2074, 4294901760
      %2076 = vmatmul.mubr.f32.gmra.mrb[0].mxu0 %v2075
      %v2077 = vpop.f32.mrb[0].mxu0
      %v2078 = vadd.f32 %v1762, %v2077
      %v2079 = vpop.f32.mrb[0].mxu0
      %2080 = vmatprep.mubr.f32.mxu0 0.0
      %v2081 = vand.u32 %v839, 4294901760
      %v2082 = vsub.f32 %v839, %v2081
      %v2083 = vand.u32 %v2082, 4294901760
      %2084 = vmatmul.mubr.f32.gmra.mrb[0].mxu0 %v2083
      %v2085 = vpop.f32.mrb[0].mxu0
      %v2086 = vadd.f32 %v1769, %v2085
      %v2087 = vpop.f32.mrb[0].mxu0
      %2088 = vmatprep.mubr.f32.mxu0 0.0
      %v2089 = vand.u32 %v842, 4294901760
      %v2090 = vsub.f32 %v842, %v2089
      %v2091 = vand.u32 %v2090, 4294901760
      %2092 = vmatmul.mubr.f32.gmra.mrb[0].mxu0 %v2091
      %v2093 = vpop.f32.mrb[0].mxu0
      %v2094 = vadd.f32 %v1776, %v2093
      %v2095 = vpop.f32.mrb[0].mxu0
      %2096 = vmatprep.mubr.f32.mxu0 0.0
      %v2097 = vand.u32 %v845, 4294901760
      %v2098 = vsub.f32 %v845, %v2097
      %v2099 = vand.u32 %v2098, 4294901760
      %2100 = vmatmul.mubr.f32.gmra.mrb[0].mxu0 %v2099
      %v2101 = vpop.f32.mrb[0].mxu0
      %v2102 = vadd.f32 %v1783, %v2101
      %v2103 = vpop.f32.mrb[0].mxu0
      %2104 = vmatprep.mubr.f32.mxu0 0.0
      %v2105 = vand.u32 %v848, 4294901760
      %v2106 = vsub.f32 %v848, %v2105
      %v2107 = vand.u32 %v2106, 4294901760
      %2108 = vmatmul.mubr.f32.gmra.mrb[0].mxu0 %v2107
      %v2109 = vpop.f32.mrb[0].mxu0
      %v2110 = vadd.f32 %v1790, %v2109
      %v2111 = vpop.f32.mrb[0].mxu0
      %2112 = vmatprep.mubr.f32.mxu0 0.0
      %v2113 = vand.u32 %v851, 4294901760
      %v2114 = vsub.f32 %v851, %v2113
      %v2115 = vand.u32 %v2114, 4294901760
      %2116 = vmatmul.mubr.f32.gmra.mrb[0].mxu0 %v2115
      %v2117 = vpop.f32.mrb[0].mxu0
      %v2118 = vadd.f32 %v1797, %v2117
      %v2119 = vpop.f32.mrb[0].mxu0
      %2120 = vmatprep.mubr.f32.mxu0 0.0
      %v2121 = vand.u32 %v854, 4294901760
      %v2122 = vsub.f32 %v854, %v2121
      %v2123 = vand.u32 %v2122, 4294901760
      %2124 = vmatmul.mubr.f32.gmra.mrb[0].mxu0 %v2123
      %v2125 = vpop.f32.mrb[0].mxu0
      %v2126 = vadd.f32 %v1804, %v2125
      %v2127 = vpop.f32.mrb[0].mxu0
      %2128 = vmatprep.mubr.f32.mxu0 0.0
      %v2129 = vand.u32 %v857, 4294901760
      %v2130 = vsub.f32 %v857, %v2129
      %v2131 = vand.u32 %v2130, 4294901760
      %2132 = vmatmul.mubr.f32.gmra.mrb[0].mxu0 %v2131
      %v2133 = vpop.f32.mrb[0].mxu0
      %v2134 = vadd.f32 %v1811, %v2133
      %v2135 = vpop.f32.mrb[0].mxu0
      %2136 = vmatprep.mubr.f32.mxu0 0.0
      %v2137 = vand.u32 %v860, 4294901760
      %v2138 = vsub.f32 %v860, %v2137
      %v2139 = vand.u32 %v2138, 4294901760
      %2140 = vmatmul.mubr.f32.gmra.mrb[0].mxu0 %v2139
      %v2141 = vpop.f32.mrb[0].mxu0
      %v2142 = vadd.f32 %v1818, %v2141
      %v2143 = vpop.f32.mrb[0].mxu0
      %2144 = vmatprep.mubr.f32.mxu0 0.0
      %v2145 = vand.u32 %v863, 4294901760
      %v2146 = vsub.f32 %v863, %v2145
      %v2147 = vand.u32 %v2146, 4294901760
      %2148 = vmatmul.mubr.f32.gmra.mrb[0].mxu0 %v2147
      %v2149 = vpop.f32.mrb[0].mxu0
      %v2150 = vadd.f32 %v1825, %v2149
      %v2151 = vpop.f32.mrb[0].mxu0
      %2152 = vdwg.mxu0
      %2153 = vmatprep.subr.mxu0 0.0
      %v2154 = vand.u32 %v765, 4294901760
      %v2155 = vsub.f32 %v765, %v2154
      %v2156 = vand.u32 %v2155, 4294901760
      %2157 = vmatpush1.msra.mxu0 %v2156
      %2158 = vmatprep.subr.mxu0 0.0
      %v2159 = vand.u32 %v766, 4294901760
      %v2160 = vsub.f32 %v766, %v2159
      %v2161 = vand.u32 %v2160, 4294901760
      %2162 = vmatpush1.msra.mxu0 %v2161
      %2163 = vmatprep.subr.mxu0 0.0
      %v2164 = vand.u32 %v767, 4294901760
      %v2165 = vsub.f32 %v767, %v2164
      %v2166 = vand.u32 %v2165, 4294901760
      %2167 = vmatpush1.msra.mxu0 %v2166
      %2168 = vmatprep.subr.mxu0 0.0
      %v2169 = vand.u32 %v768, 4294901760
      %v2170 = vsub.f32 %v768, %v2169
      %v2171 = vand.u32 %v2170, 4294901760
      %2172 = vmatpush1.msra.mxu0 %v2171
      %2173 = vmatprep.subr.mxu0 0.0
      %2174 = vmatpush1.msra.mxu0 0.0
      %2175 = vmatprep.subr.mxu0 0.0
      %2176 = vmatpush1.msra.mxu0 0.0
      %2177 = vmatprep.subr.mxu0 0.0
      %2178 = vmatpush1.msra.mxu0 0.0
      %2179 = vmatprep.subr.mxu0 0.0
      %2180 = vmatpush1.msra.mxu0 0.0
      %2181 = vmatprep.subr.mxu0 0.0
      %2182 = vmatpush1.msra.mxu0 0.0
      %2183 = vmatprep.subr.mxu0 0.0
      %2184 = vmatpush1.msra.mxu0 0.0
      %2185 = vmatprep.subr.mxu0 0.0
      %2186 = vmatpush1.msra.mxu0 0.0
      %2187 = vmatprep.subr.mxu0 0.0
      %2188 = vmatpush1.msra.mxu0 0.0
      %2189 = vmatprep.subr.mxu0 0.0
      %2190 = vmatpush1.msra.mxu0 0.0
      %2191 = vmatprep.subr.mxu0 0.0
      %2192 = vmatpush1.msra.mxu0 0.0
      %2193 = vmatprep.subr.mxu0 0.0
      %2194 = vmatpush1.msra.mxu0 0.0
      %2195 = vmatprep.subr.mxu0 0.0
      %2196 = vmatpush1.msra.mxu0 0.0
      %2197 = vmatprep.subr.mxu0 0.0
      %2198 = vmatpush1.msra.mxu0 0.0
      %2199 = vmatprep.subr.mxu0 0.0
      %2200 = vmatpush1.msra.mxu0 0.0
      %2201 = vmatprep.subr.mxu0 0.0
      %2202 = vmatpush1.msra.mxu0 0.0
      %2203 = vmatprep.subr.mxu0 0.0
      %2204 = vmatpush1.msra.mxu0 0.0
      %2205 = vmatprep.subr.mxu0 0.0
      %2206 = vmatpush1.msra.mxu0 0.0
      %2207 = vmatprep.subr.mxu0 0.0
      %2208 = vmatpush1.msra.mxu0 0.0
      %2209 = vmatprep.subr.mxu0 0.0
      %2210 = vmatpush1.msra.mxu0 0.0
      %2211 = vmatprep.subr.mxu0 0.0
      %2212 = vmatpush1.msra.mxu0 0.0
      %2213 = vmatprep.subr.mxu0 0.0
      %2214 = vmatpush1.msra.mxu0 0.0
      %2215 = vmatprep.subr.mxu0 0.0
      %2216 = vmatpush1.msra.mxu0 0.0
      %2217 = vmatprep.subr.mxu0 0.0
      %2218 = vmatpush1.msra.mxu0 0.0
      %2219 = vmatprep.subr.mxu0 0.0
      %2220 = vmatpush1.msra.mxu0 0.0
      %2221 = vmatprep.subr.mxu0 0.0
      %2222 = vmatpush1.msra.mxu0 0.0
      %2223 = vmatprep.subr.mxu0 0.0
      %2224 = vmatpush1.msra.mxu0 0.0
      %2225 = vmatprep.subr.mxu0 0.0
      %2226 = vmatpush1.msra.mxu0 0.0
      %2227 = vmatprep.subr.mxu0 0.0
      %2228 = vmatpush1.msra.mxu0 0.0
      %2229 = vmatprep.mubr.f32.mxu0 0.0
      %v2230 = vand.u32 %v770, 4294901760
      %2231 = vmatmul.mubr.f32.gmra.mrb[0].mxu0 %v2230
      %v2232 = vpop.f32.mrb[0].mxu0
      %v2233 = vadd.f32 %v1902, %v2232
      %v2234 = vpop.f32.mrb[0].mxu0
      %2235 = vmatprep.mubr.f32.mxu0 0.0
      %v2236 = vand.u32 %v773, 4294901760
      %2237 = vmatmul.mubr.f32.gmra.mrb[0].mxu0 %v2236
      %v2238 = vpop.f32.mrb[0].mxu0
      %v2239 = vadd.f32 %v1910, %v2238
      %v2240 = vpop.f32.mrb[0].mxu0
      %2241 = vmatprep.mubr.f32.mxu0 0.0
      %v2242 = vand.u32 %v776, 4294901760
      %2243 = vmatmul.mubr.f32.gmra.mrb[0].mxu0 %v2242
      %v2244 = vpop.f32.mrb[0].mxu0
      %v2245 = vadd.f32 %v1918, %v2244
      %v2246 = vpop.f32.mrb[0].mxu0
      %2247 = vmatprep.mubr.f32.mxu0 0.0
      %v2248 = vand.u32 %v779, 4294901760
      %2249 = vmatmul.mubr.f32.gmra.mrb[0].mxu0 %v2248
      %v2250 = vpop.f32.mrb[0].mxu0
      %v2251 = vadd.f32 %v1926, %v2250
      %v2252 = vpop.f32.mrb[0].mxu0
      %2253 = vmatprep.mubr.f32.mxu0 0.0
      %v2254 = vand.u32 %v782, 4294901760
      %2255 = vmatmul.mubr.f32.gmra.mrb[0].mxu0 %v2254
      %v2256 = vpop.f32.mrb[0].mxu0
      %v2257 = vadd.f32 %v1934, %v2256
      %v2258 = vpop.f32.mrb[0].mxu0
      %2259 = vmatprep.mubr.f32.mxu0 0.0
      %v2260 = vand.u32 %v785, 4294901760
      %2261 = vmatmul.mubr.f32.gmra.mrb[0].mxu0 %v2260
      %v2262 = vpop.f32.mrb[0].mxu0
      %v2263 = vadd.f32 %v1942, %v2262
      %v2264 = vpop.f32.mrb[0].mxu0
      %2265 = vmatprep.mubr.f32.mxu0 0.0
      %v2266 = vand.u32 %v788, 4294901760
      %2267 = vmatmul.mubr.f32.gmra.mrb[0].mxu0 %v2266
      %v2268 = vpop.f32.mrb[0].mxu0
      %v2269 = vadd.f32 %v1950, %v2268
      %v2270 = vpop.f32.mrb[0].mxu0
      %2271 = vmatprep.mubr.f32.mxu0 0.0
      %v2272 = vand.u32 %v791, 4294901760
      %2273 = vmatmul.mubr.f32.gmra.mrb[0].mxu0 %v2272
      %v2274 = vpop.f32.mrb[0].mxu0
      %v2275 = vadd.f32 %v1958, %v2274
      %v2276 = vpop.f32.mrb[0].mxu0
      %2277 = vmatprep.mubr.f32.mxu0 0.0
      %v2278 = vand.u32 %v794, 4294901760
      %2279 = vmatmul.mubr.f32.gmra.mrb[0].mxu0 %v2278
      %v2280 = vpop.f32.mrb[0].mxu0
      %v2281 = vadd.f32 %v1966, %v2280
      %v2282 = vpop.f32.mrb[0].mxu0
      %2283 = vmatprep.mubr.f32.mxu0 0.0
      %v2284 = vand.u32 %v797, 4294901760
      %2285 = vmatmul.mubr.f32.gmra.mrb[0].mxu0 %v2284
      %v2286 = vpop.f32.mrb[0].mxu0
      %v2287 = vadd.f32 %v1974, %v2286
      %v2288 = vpop.f32.mrb[0].mxu0
      %2289 = vmatprep.mubr.f32.mxu0 0.0
      %v2290 = vand.u32 %v800, 4294901760
      %2291 = vmatmul.mubr.f32.gmra.mrb[0].mxu0 %v2290
      %v2292 = vpop.f32.mrb[0].mxu0
      %v2293 = vadd.f32 %v1982, %v2292
      %v2294 = vpop.f32.mrb[0].mxu0
      %2295 = vmatprep.mubr.f32.mxu0 0.0
      %v2296 = vand.u32 %v803, 4294901760
      %2297 = vmatmul.mubr.f32.gmra.mrb[0].mxu0 %v2296
      %v2298 = vpop.f32.mrb[0].mxu0
      %v2299 = vadd.f32 %v1990, %v2298
      %v2300 = vpop.f32.mrb[0].mxu0
      %2301 = vmatprep.mubr.f32.mxu0 0.0
      %v2302 = vand.u32 %v806, 4294901760
      %2303 = vmatmul.mubr.f32.gmra.mrb[0].mxu0 %v2302
      %v2304 = vpop.f32.mrb[0].mxu0
      %v2305 = vadd.f32 %v1998, %v2304
      %v2306 = vpop.f32.mrb[0].mxu0
      %2307 = vmatprep.mubr.f32.mxu0 0.0
      %v2308 = vand.u32 %v809, 4294901760
      %2309 = vmatmul.mubr.f32.gmra.mrb[0].mxu0 %v2308
      %v2310 = vpop.f32.mrb[0].mxu0
      %v2311 = vadd.f32 %v2006, %v2310
      %v2312 = vpop.f32.mrb[0].mxu0
      %2313 = vmatprep.mubr.f32.mxu0 0.0
      %v2314 = vand.u32 %v812, 4294901760
      %2315 = vmatmul.mubr.f32.gmra.mrb[0].mxu0 %v2314
      %v2316 = vpop.f32.mrb[0].mxu0
      %v2317 = vadd.f32 %v2014, %v2316
      %v2318 = vpop.f32.mrb[0].mxu0
      %2319 = vmatprep.mubr.f32.mxu0 0.0
      %v2320 = vand.u32 %v815, 4294901760
      %2321 = vmatmul.mubr.f32.gmra.mrb[0].mxu0 %v2320
      %v2322 = vpop.f32.mrb[0].mxu0
      %v2323 = vadd.f32 %v2022, %v2322
      %v2324 = vpop.f32.mrb[0].mxu0
      %2325 = vmatprep.mubr.f32.mxu0 0.0
      %v2326 = vand.u32 %v818, 4294901760
      %2327 = vmatmul.mubr.f32.gmra.mrb[0].mxu0 %v2326
      %v2328 = vpop.f32.mrb[0].mxu0
      %v2329 = vadd.f32 %v2030, %v2328
      %v2330 = vpop.f32.mrb[0].mxu0
      %2331 = vmatprep.mubr.f32.mxu0 0.0
      %v2332 = vand.u32 %v821, 4294901760
      %2333 = vmatmul.mubr.f32.gmra.mrb[0].mxu0 %v2332
      %v2334 = vpop.f32.mrb[0].mxu0
      %v2335 = vadd.f32 %v2038, %v2334
      %v2336 = vpop.f32.mrb[0].mxu0
      %2337 = vmatprep.mubr.f32.mxu0 0.0
      %v2338 = vand.u32 %v824, 4294901760
      %2339 = vmatmul.mubr.f32.gmra.mrb[0].mxu0 %v2338
      %v2340 = vpop.f32.mrb[0].mxu0
      %v2341 = vadd.f32 %v2046, %v2340
      %v2342 = vpop.f32.mrb[0].mxu0
      %2343 = vmatprep.mubr.f32.mxu0 0.0
      %v2344 = vand.u32 %v827, 4294901760
      %2345 = vmatmul.mubr.f32.gmra.mrb[0].mxu0 %v2344
      %v2346 = vpop.f32.mrb[0].mxu0
      %v2347 = vadd.f32 %v2054, %v2346
      %v2348 = vpop.f32.mrb[0].mxu0
      %2349 = vmatprep.mubr.f32.mxu0 0.0
      %v2350 = vand.u32 %v830, 4294901760
      %2351 = vmatmul.mubr.f32.gmra.mrb[0].mxu0 %v2350
      %v2352 = vpop.f32.mrb[0].mxu0
      %v2353 = vadd.f32 %v2062, %v2352
      %v2354 = vpop.f32.mrb[0].mxu0
      %2355 = vmatprep.mubr.f32.mxu0 0.0
      %v2356 = vand.u32 %v833, 4294901760
      %2357 = vmatmul.mubr.f32.gmra.mrb[0].mxu0 %v2356
      %v2358 = vpop.f32.mrb[0].mxu0
      %v2359 = vadd.f32 %v2070, %v2358
      %v2360 = vpop.f32.mrb[0].mxu0
      %2361 = vmatprep.mubr.f32.mxu0 0.0
      %v2362 = vand.u32 %v836, 4294901760
      %2363 = vmatmul.mubr.f32.gmra.mrb[0].mxu0 %v2362
      %v2364 = vpop.f32.mrb[0].mxu0
      %v2365 = vadd.f32 %v2078, %v2364
      %v2366 = vpop.f32.mrb[0].mxu0
      %2367 = vmatprep.mubr.f32.mxu0 0.0
      %v2368 = vand.u32 %v839, 4294901760
      %2369 = vmatmul.mubr.f32.gmra.mrb[0].mxu0 %v2368
      %v2370 = vpop.f32.mrb[0].mxu0
      %v2371 = vadd.f32 %v2086, %v2370
      %v2372 = vpop.f32.mrb[0].mxu0
      %2373 = vmatprep.mubr.f32.mxu0 0.0
      %v2374 = vand.u32 %v842, 4294901760
      %2375 = vmatmul.mubr.f32.gmra.mrb[0].mxu0 %v2374
      %v2376 = vpop.f32.mrb[0].mxu0
      %v2377 = vadd.f32 %v2094, %v2376
      %v2378 = vpop.f32.mrb[0].mxu0
      %2379 = vmatprep.mubr.f32.mxu0 0.0
      %v2380 = vand.u32 %v845, 4294901760
      %2381 = vmatmul.mubr.f32.gmra.mrb[0].mxu0 %v2380
      %v2382 = vpop.f32.mrb[0].mxu0
      %v2383 = vadd.f32 %v2102, %v2382
      %v2384 = vpop.f32.mrb[0].mxu0
      %2385 = vmatprep.mubr.f32.mxu0 0.0
      %v2386 = vand.u32 %v848, 4294901760
      %2387 = vmatmul.mubr.f32.gmra.mrb[0].mxu0 %v2386
      %v2388 = vpop.f32.mrb[0].mxu0
      %v2389 = vadd.f32 %v2110, %v2388
      %v2390 = vpop.f32.mrb[0].mxu0
      %2391 = vmatprep.mubr.f32.mxu0 0.0
      %v2392 = vand.u32 %v851, 4294901760
      %2393 = vmatmul.mubr.f32.gmra.mrb[0].mxu0 %v2392
      %v2394 = vpop.f32.mrb[0].mxu0
      %v2395 = vadd.f32 %v2118, %v2394
      %v2396 = vpop.f32.mrb[0].mxu0
      %2397 = vmatprep.mubr.f32.mxu0 0.0
      %v2398 = vand.u32 %v854, 4294901760
      %2399 = vmatmul.mubr.f32.gmra.mrb[0].mxu0 %v2398
      %v2400 = vpop.f32.mrb[0].mxu0
      %v2401 = vadd.f32 %v2126, %v2400
      %v2402 = vpop.f32.mrb[0].mxu0
      %2403 = vmatprep.mubr.f32.mxu0 0.0
      %v2404 = vand.u32 %v857, 4294901760
      %2405 = vmatmul.mubr.f32.gmra.mrb[0].mxu0 %v2404
      %v2406 = vpop.f32.mrb[0].mxu0
      %v2407 = vadd.f32 %v2134, %v2406
      %v2408 = vpop.f32.mrb[0].mxu0
      %2409 = vmatprep.mubr.f32.mxu0 0.0
      %v2410 = vand.u32 %v860, 4294901760
      %2411 = vmatmul.mubr.f32.gmra.mrb[0].mxu0 %v2410
      %v2412 = vpop.f32.mrb[0].mxu0
      %v2413 = vadd.f32 %v2142, %v2412
      %v2414 = vpop.f32.mrb[0].mxu0
      %2415 = vmatprep.mubr.f32.mxu0 0.0
      %v2416 = vand.u32 %v863, 4294901760
      %2417 = vmatmul.mubr.f32.gmra.mrb[0].mxu0 %v2416
      %v2418 = vpop.f32.mrb[0].mxu0
      %v2419 = vadd.f32 %v2150, %v2418
      %v2420 = vpop.f32.mrb[0].mxu0
      %2421 = vdwg.mxu0
      %2422 = vmatprep.subr.mxu0 0.0
      %v2423 = vand.u32 %v765, 4294901760
      %2424 = vmatpush1.msra.mxu0 %v2423
      %2425 = vmatprep.subr.mxu0 0.0
      %v2426 = vand.u32 %v766, 4294901760
      %2427 = vmatpush1.msra.mxu0 %v2426
      %2428 = vmatprep.subr.mxu0 0.0
      %v2429 = vand.u32 %v767, 4294901760
      %2430 = vmatpush1.msra.mxu0 %v2429
      %2431 = vmatprep.subr.mxu0 0.0
      %v2432 = vand.u32 %v768, 4294901760
      %2433 = vmatpush1.msra.mxu0 %v2432
      %2434 = vmatprep.subr.mxu0 0.0
      %2435 = vmatpush1.msra.mxu0 0.0
      %2436 = vmatprep.subr.mxu0 0.0
      %2437 = vmatpush1.msra.mxu0 0.0
      %2438 = vmatprep.subr.mxu0 0.0
      %2439 = vmatpush1.msra.mxu0 0.0
      %2440 = vmatprep.subr.mxu0 0.0
      %2441 = vmatpush1.msra.mxu0 0.0
      %2442 = vmatprep.subr.mxu0 0.0
      %2443 = vmatpush1.msra.mxu0 0.0
      %2444 = vmatprep.subr.mxu0 0.0
      %2445 = vmatpush1.msra.mxu0 0.0
      %2446 = vmatprep.subr.mxu0 0.0
      %2447 = vmatpush1.msra.mxu0 0.0
      %2448 = vmatprep.subr.mxu0 0.0
      %2449 = vmatpush1.msra.mxu0 0.0
      %2450 = vmatprep.subr.mxu0 0.0
      %2451 = vmatpush1.msra.mxu0 0.0
      %2452 = vmatprep.subr.mxu0 0.0
      %2453 = vmatpush1.msra.mxu0 0.0
      %2454 = vmatprep.subr.mxu0 0.0
      %2455 = vmatpush1.msra.mxu0 0.0
      %2456 = vmatprep.subr.mxu0 0.0
      %2457 = vmatpush1.msra.mxu0 0.0
      %2458 = vmatprep.subr.mxu0 0.0
      %2459 = vmatpush1.msra.mxu0 0.0
      %2460 = vmatprep.subr.mxu0 0.0
      %2461 = vmatpush1.msra.mxu0 0.0
      %2462 = vmatprep.subr.mxu0 0.0
      %2463 = vmatpush1.msra.mxu0 0.0
      %2464 = vmatprep.subr.mxu0 0.0
      %2465 = vmatpush1.msra.mxu0 0.0
      %2466 = vmatprep.subr.mxu0 0.0
      %2467 = vmatpush1.msra.mxu0 0.0
      %2468 = vmatprep.subr.mxu0 0.0
      %2469 = vmatpush1.msra.mxu0 0.0
      %2470 = vmatprep.subr.mxu0 0.0
      %2471 = vmatpush1.msra.mxu0 0.0
      %2472 = vmatprep.subr.mxu0 0.0
      %2473 = vmatpush1.msra.mxu0 0.0
      %2474 = vmatprep.subr.mxu0 0.0
      %2475 = vmatpush1.msra.mxu0 0.0
      %2476 = vmatprep.subr.mxu0 0.0
      %2477 = vmatpush1.msra.mxu0 0.0
      %2478 = vmatprep.subr.mxu0 0.0
      %2479 = vmatpush1.msra.mxu0 0.0
      %2480 = vmatprep.subr.mxu0 0.0
      %2481 = vmatpush1.msra.mxu0 0.0
      %2482 = vmatprep.subr.mxu0 0.0
      %2483 = vmatpush1.msra.mxu0 0.0
      %2484 = vmatprep.subr.mxu0 0.0
      %2485 = vmatpush1.msra.mxu0 0.0
      %2486 = vmatprep.subr.mxu0 0.0
      %2487 = vmatpush1.msra.mxu0 0.0
      %2488 = vmatprep.subr.mxu0 0.0
      %2489 = vmatpush1.msra.mxu0 0.0
      %2490 = vmatprep.mubr.f32.mxu0 0.0
      %v2491 = vand.u32 %v770, 4294901760
      %2492 = vmatmul.mubr.f32.gmra.mrb[0].mxu0 %v2491
      %v2493 = vpop.f32.mrb[0].mxu0
      %v2494 = vadd.f32 %v2233, %v2493
      %v2495 = vpop.f32.mrb[0].mxu0
      %2496 = vmatprep.mubr.f32.mxu0 0.0
      %v2497 = vand.u32 %v773, 4294901760
      %2498 = vmatmul.mubr.f32.gmra.mrb[0].mxu0 %v2497
      %v2499 = vpop.f32.mrb[0].mxu0
      %v2500 = vadd.f32 %v2239, %v2499
      %v2501 = vpop.f32.mrb[0].mxu0
      %2502 = vmatprep.mubr.f32.mxu0 0.0
      %v2503 = vand.u32 %v776, 4294901760
      %2504 = vmatmul.mubr.f32.gmra.mrb[0].mxu0 %v2503
      %v2505 = vpop.f32.mrb[0].mxu0
      %v2506 = vadd.f32 %v2245, %v2505
      %v2507 = vpop.f32.mrb[0].mxu0
      %2508 = vmatprep.mubr.f32.mxu0 0.0
      %v2509 = vand.u32 %v779, 4294901760
      %2510 = vmatmul.mubr.f32.gmra.mrb[0].mxu0 %v2509
      %v2511 = vpop.f32.mrb[0].mxu0
      %v2512 = vadd.f32 %v2251, %v2511
      %v2513 = vpop.f32.mrb[0].mxu0
      %2514 = vmatprep.mubr.f32.mxu0 0.0
      %v2515 = vand.u32 %v782, 4294901760
      %2516 = vmatmul.mubr.f32.gmra.mrb[0].mxu0 %v2515
      %v2517 = vpop.f32.mrb[0].mxu0
      %v2518 = vadd.f32 %v2257, %v2517
      %v2519 = vpop.f32.mrb[0].mxu0
      %2520 = vmatprep.mubr.f32.mxu0 0.0
      %v2521 = vand.u32 %v785, 4294901760
      %2522 = vmatmul.mubr.f32.gmra.mrb[0].mxu0 %v2521
      %v2523 = vpop.f32.mrb[0].mxu0
      %v2524 = vadd.f32 %v2263, %v2523
      %v2525 = vpop.f32.mrb[0].mxu0
      %2526 = vmatprep.mubr.f32.mxu0 0.0
      %v2527 = vand.u32 %v788, 4294901760
      %2528 = vmatmul.mubr.f32.gmra.mrb[0].mxu0 %v2527
      %v2529 = vpop.f32.mrb[0].mxu0
      %v2530 = vadd.f32 %v2269, %v2529
      %v2531 = vpop.f32.mrb[0].mxu0
      %2532 = vmatprep.mubr.f32.mxu0 0.0
      %v2533 = vand.u32 %v791, 4294901760
      %2534 = vmatmul.mubr.f32.gmra.mrb[0].mxu0 %v2533
      %v2535 = vpop.f32.mrb[0].mxu0
      %v2536 = vadd.f32 %v2275, %v2535
      %v2537 = vpop.f32.mrb[0].mxu0
      %2538 = vmatprep.mubr.f32.mxu0 0.0
      %v2539 = vand.u32 %v794, 4294901760
      %2540 = vmatmul.mubr.f32.gmra.mrb[0].mxu0 %v2539
      %v2541 = vpop.f32.mrb[0].mxu0
      %v2542 = vadd.f32 %v2281, %v2541
      %v2543 = vpop.f32.mrb[0].mxu0
      %2544 = vmatprep.mubr.f32.mxu0 0.0
      %v2545 = vand.u32 %v797, 4294901760
      %2546 = vmatmul.mubr.f32.gmra.mrb[0].mxu0 %v2545
      %v2547 = vpop.f32.mrb[0].mxu0
      %v2548 = vadd.f32 %v2287, %v2547
      %v2549 = vpop.f32.mrb[0].mxu0
      %2550 = vmatprep.mubr.f32.mxu0 0.0
      %v2551 = vand.u32 %v800, 4294901760
      %2552 = vmatmul.mubr.f32.gmra.mrb[0].mxu0 %v2551
      %v2553 = vpop.f32.mrb[0].mxu0
      %v2554 = vadd.f32 %v2293, %v2553
      %v2555 = vpop.f32.mrb[0].mxu0
      %2556 = vmatprep.mubr.f32.mxu0 0.0
      %v2557 = vand.u32 %v803, 4294901760
      %2558 = vmatmul.mubr.f32.gmra.mrb[0].mxu0 %v2557
      %v2559 = vpop.f32.mrb[0].mxu0
      %v2560 = vadd.f32 %v2299, %v2559
      %v2561 = vpop.f32.mrb[0].mxu0
      %2562 = vmatprep.mubr.f32.mxu0 0.0
      %v2563 = vand.u32 %v806, 4294901760
      %2564 = vmatmul.mubr.f32.gmra.mrb[0].mxu0 %v2563
      %v2565 = vpop.f32.mrb[0].mxu0
      %v2566 = vadd.f32 %v2305, %v2565
      %v2567 = vpop.f32.mrb[0].mxu0
      %2568 = vmatprep.mubr.f32.mxu0 0.0
      %v2569 = vand.u32 %v809, 4294901760
      %2570 = vmatmul.mubr.f32.gmra.mrb[0].mxu0 %v2569
      %v2571 = vpop.f32.mrb[0].mxu0
      %v2572 = vadd.f32 %v2311, %v2571
      %v2573 = vpop.f32.mrb[0].mxu0
      %2574 = vmatprep.mubr.f32.mxu0 0.0
      %v2575 = vand.u32 %v812, 4294901760
      %2576 = vmatmul.mubr.f32.gmra.mrb[0].mxu0 %v2575
      %v2577 = vpop.f32.mrb[0].mxu0
      %v2578 = vadd.f32 %v2317, %v2577
      %v2579 = vpop.f32.mrb[0].mxu0
      %2580 = vmatprep.mubr.f32.mxu0 0.0
      %v2581 = vand.u32 %v815, 4294901760
      %2582 = vmatmul.mubr.f32.gmra.mrb[0].mxu0 %v2581
      %v2583 = vpop.f32.mrb[0].mxu0
      %v2584 = vadd.f32 %v2323, %v2583
      %v2585 = vpop.f32.mrb[0].mxu0
      %2586 = vmatprep.mubr.f32.mxu0 0.0
      %v2587 = vand.u32 %v818, 4294901760
      %2588 = vmatmul.mubr.f32.gmra.mrb[0].mxu0 %v2587
      %v2589 = vpop.f32.mrb[0].mxu0
      %v2590 = vadd.f32 %v2329, %v2589
      %v2591 = vpop.f32.mrb[0].mxu0
      %2592 = vmatprep.mubr.f32.mxu0 0.0
      %v2593 = vand.u32 %v821, 4294901760
      %2594 = vmatmul.mubr.f32.gmra.mrb[0].mxu0 %v2593
      %v2595 = vpop.f32.mrb[0].mxu0
      %v2596 = vadd.f32 %v2335, %v2595
      %v2597 = vpop.f32.mrb[0].mxu0
      %2598 = vmatprep.mubr.f32.mxu0 0.0
      %v2599 = vand.u32 %v824, 4294901760
      %2600 = vmatmul.mubr.f32.gmra.mrb[0].mxu0 %v2599
      %v2601 = vpop.f32.mrb[0].mxu0
      %v2602 = vadd.f32 %v2341, %v2601
      %v2603 = vpop.f32.mrb[0].mxu0
      %2604 = vmatprep.mubr.f32.mxu0 0.0
      %v2605 = vand.u32 %v827, 4294901760
      %2606 = vmatmul.mubr.f32.gmra.mrb[0].mxu0 %v2605
      %v2607 = vpop.f32.mrb[0].mxu0
      %v2608 = vadd.f32 %v2347, %v2607
      %v2609 = vpop.f32.mrb[0].mxu0
      %2610 = vmatprep.mubr.f32.mxu0 0.0
      %v2611 = vand.u32 %v830, 4294901760
      %2612 = vmatmul.mubr.f32.gmra.mrb[0].mxu0 %v2611
      %v2613 = vpop.f32.mrb[0].mxu0
      %v2614 = vadd.f32 %v2353, %v2613
      %v2615 = vpop.f32.mrb[0].mxu0
      %2616 = vmatprep.mubr.f32.mxu0 0.0
      %v2617 = vand.u32 %v833, 4294901760
      %2618 = vmatmul.mubr.f32.gmra.mrb[0].mxu0 %v2617
      %v2619 = vpop.f32.mrb[0].mxu0
      %v2620 = vadd.f32 %v2359, %v2619
      %v2621 = vpop.f32.mrb[0].mxu0
      %2622 = vmatprep.mubr.f32.mxu0 0.0
      %v2623 = vand.u32 %v836, 4294901760
      %2624 = vmatmul.mubr.f32.gmra.mrb[0].mxu0 %v2623
      %v2625 = vpop.f32.mrb[0].mxu0
      %v2626 = vadd.f32 %v2365, %v2625
      %v2627 = vpop.f32.mrb[0].mxu0
      %2628 = vmatprep.mubr.f32.mxu0 0.0
      %v2629 = vand.u32 %v839, 4294901760
      %2630 = vmatmul.mubr.f32.gmra.mrb[0].mxu0 %v2629
      %v2631 = vpop.f32.mrb[0].mxu0
      %v2632 = vadd.f32 %v2371, %v2631
      %v2633 = vpop.f32.mrb[0].mxu0
      %2634 = vmatprep.mubr.f32.mxu0 0.0
      %v2635 = vand.u32 %v842, 4294901760
      %2636 = vmatmul.mubr.f32.gmra.mrb[0].mxu0 %v2635
      %v2637 = vpop.f32.mrb[0].mxu0
      %v2638 = vadd.f32 %v2377, %v2637
      %v2639 = vpop.f32.mrb[0].mxu0
      %2640 = vmatprep.mubr.f32.mxu0 0.0
      %v2641 = vand.u32 %v845, 4294901760
      %2642 = vmatmul.mubr.f32.gmra.mrb[0].mxu0 %v2641
      %v2643 = vpop.f32.mrb[0].mxu0
      %v2644 = vadd.f32 %v2383, %v2643
      %v2645 = vpop.f32.mrb[0].mxu0
      %2646 = vmatprep.mubr.f32.mxu0 0.0
      %v2647 = vand.u32 %v848, 4294901760
      %2648 = vmatmul.mubr.f32.gmra.mrb[0].mxu0 %v2647
      %v2649 = vpop.f32.mrb[0].mxu0
      %v2650 = vadd.f32 %v2389, %v2649
      %v2651 = vpop.f32.mrb[0].mxu0
      %2652 = vmatprep.mubr.f32.mxu0 0.0
      %v2653 = vand.u32 %v851, 4294901760
      %2654 = vmatmul.mubr.f32.gmra.mrb[0].mxu0 %v2653
      %v2655 = vpop.f32.mrb[0].mxu0
      %v2656 = vadd.f32 %v2395, %v2655
      %v2657 = vpop.f32.mrb[0].mxu0
      %2658 = vmatprep.mubr.f32.mxu0 0.0
      %v2659 = vand.u32 %v854, 4294901760
      %2660 = vmatmul.mubr.f32.gmra.mrb[0].mxu0 %v2659
      %v2661 = vpop.f32.mrb[0].mxu0
      %v2662 = vadd.f32 %v2401, %v2661
      %v2663 = vpop.f32.mrb[0].mxu0
      %2664 = vmatprep.mubr.f32.mxu0 0.0
      %v2665 = vand.u32 %v857, 4294901760
      %2666 = vmatmul.mubr.f32.gmra.mrb[0].mxu0 %v2665
      %v2667 = vpop.f32.mrb[0].mxu0
      %v2668 = vadd.f32 %v2407, %v2667
      %v2669 = vpop.f32.mrb[0].mxu0
      %2670 = vmatprep.mubr.f32.mxu0 0.0
      %v2671 = vand.u32 %v860, 4294901760
      %2672 = vmatmul.mubr.f32.gmra.mrb[0].mxu0 %v2671
      %v2673 = vpop.f32.mrb[0].mxu0
      %v2674 = vadd.f32 %v2413, %v2673
      %v2675 = vpop.f32.mrb[0].mxu0
      %2676 = vmatprep.mubr.f32.mxu0 0.0
      %v2677 = vand.u32 %v863, 4294901760
      %2678 = vmatmul.mubr.f32.gmra.mrb[0].mxu0 %v2677
      %v2679 = vpop.f32.mrb[0].mxu0
      %v2680 = vadd.f32 %v2419, %v2679
      %v2681 = vpop.f32.mrb[0].mxu0
      %2682 = vdwg.mxu0
      %vm2683 = vcmask 523264
      %2684 = vst.msk [vmem:[%s235] sm:$0xff] %vm2683, %v2494
      %2685 = vst.msk [vmem:[%s235 + $0x8] sm:$0xff] %vm2683, %v2500
      %2686 = vst.msk [vmem:[%s235 + $0x10] sm:$0xff] %vm2683, %v2506
      %2687 = vst.msk [vmem:[%s235 + $0x18] sm:$0xff] %vm2683, %v2512
      %2688 = vst.msk [vmem:[%s235 + $0x20] sm:$0xff] %vm2683, %v2518
      %2689 = vst.msk [vmem:[%s235 + $0x28] sm:$0xff] %vm2683, %v2524
      %2690 = vst.msk [vmem:[%s235 + $0x30] sm:$0xff] %vm2683, %v2530
      %2691 = vst.msk [vmem:[%s235 + $0x38] sm:$0xff] %vm2683, %v2536
      %2692 = vst.msk [vmem:[%s235 + $0x40] sm:$0xff] %vm2683, %v2542
      %2693 = vst.msk [vmem:[%s235 + $0x48] sm:$0xff] %vm2683, %v2548
      %2694 = vst.msk [vmem:[%s235 + $0x50] sm:$0xff] %vm2683, %v2554
      %2695 = vst.msk [vmem:[%s235 + $0x58] sm:$0xff] %vm2683, %v2560
      %2696 = vst.msk [vmem:[%s235 + $0x60] sm:$0xff] %vm2683, %v2566
      %2697 = vst.msk [vmem:[%s235 + $0x68] sm:$0xff] %vm2683, %v2572
      %2698 = vst.msk [vmem:[%s235 + $0x70] sm:$0xff] %vm2683, %v2578
      %2699 = vst.msk [vmem:[%s235 + $0x78] sm:$0xff] %vm2683, %v2584
      %2700 = vst.msk [vmem:[%s235 + $0x80] sm:$0xff] %vm2683, %v2590
      %2701 = vst.msk [vmem:[%s235 + $0x88] sm:$0xff] %vm2683, %v2596
      %2702 = vst.msk [vmem:[%s235 + $0x90] sm:$0xff] %vm2683, %v2602
      %2703 = vst.msk [vmem:[%s235 + $0x98] sm:$0xff] %vm2683, %v2608
      %2704 = vst.msk [vmem:[%s235 + $0xa0] sm:$0xff] %vm2683, %v2614
      %2705 = vst.msk [vmem:[%s235 + $0xa8] sm:$0xff] %vm2683, %v2620
      %2706 = vst.msk [vmem:[%s235 + $0xb0] sm:$0xff] %vm2683, %v2626
      %2707 = vst.msk [vmem:[%s235 + $0xb8] sm:$0xff] %vm2683, %v2632
      %2708 = vst.msk [vmem:[%s235 + $0xc0] sm:$0xff] %vm2683, %v2638
      %2709 = vst.msk [vmem:[%s235 + $0xc8] sm:$0xff] %vm2683, %v2644
      %2710 = vst.msk [vmem:[%s235 + $0xd0] sm:$0xff] %vm2683, %v2650
      %2711 = vst.msk [vmem:[%s235 + $0xd8] sm:$0xff] %vm2683, %v2656
      %2712 = vst.msk [vmem:[%s235 + $0xe0] sm:$0xff] %vm2683, %v2662
      %2713 = vst.msk [vmem:[%s235 + $0xe8] sm:$0xff] %vm2683, %v2668
      %2714 = vst.msk [vmem:[%s235 + $0xf0] sm:$0xff] %vm2683, %v2674
      %2715 = vst.msk [vmem:[%s235 + $0xf8] sm:$0xff] %vm2683, %v2680
      %s2716 = smul.u32 32, %s20
      %p2717 = scmp.lt.s32.totalorder %s19, 1
      %s2718 = scalar_select %p2717, %s19, 1
      %p2719 = scmp.lt.s32.totalorder %s2716, 31
      %s2720 = scalar_select %p2719, %s2716, 31
      %s2721 = smul.addr %s2718, 32
      %s2722 = sadd.s32 %s2720, %s2721
      %s2723 = smul.addr %s2722, 8
      %s2724 = scalar_lea.vmem %s4, %s2723
      // Predicated region
      $region37: #{tpu_custom_call.1} parent=35 // pred_check
        %p2725 = pneg %p138
      $region38: #{tpu_custom_call.1} parent=35 // pred_check_branch
        %2727 = sbr.rel (%p2725) target = $region40
      $region39: #{tpu_custom_call.1} parent=35 // pred_region
        %s2728 = smul.u32 32, %s20
      $region40: #{tpu_custom_call.1} parent=35 // pred_fallthru
        _
    $region36: #{tpu_custom_call.1} parent=5 // pred_fallthru
      _
    %p2729 = scmp.le.s32.totalorder 2, %s10
    // Predicated region
    $region41: #{tpu_custom_call.1} parent=5 // pred_check
      %p2730 = pneg %p2729
    $region42: #{tpu_custom_call.1} parent=5 // pred_check_branch
      %2732 = sbr.rel (%p2730) target = $region44
    $region43: #{tpu_custom_call.1} parent=5 // pred_region
      %s2733 = ssub.s32 %s10, 2
      // Predicated region
      $region45: #{tpu_custom_call.1} parent=43 // pred_check
        %p2734 = pneg %p144
      $region46: #{tpu_custom_call.1} parent=43 // pred_check_branch
        %2736 = sbr.rel (%p2734) target = $region48
      $region47: #{tpu_custom_call.1} parent=43 // pred_region
        %s2737 = smul.u32 32, %s22
        %p2738 = scmp.lt.s32.totalorder %s21, 1
        %s2739 = scalar_select %p2738, %s21, 1
        %p2740 = scmp.lt.s32.totalorder %s2737, 31
        %s2741 = scalar_select %p2740, %s2737, 31
        %s2742 = smul.addr %s2739, 32
        %s2743 = sadd.s32 %s2741, %s2742
        %s2744 = smul.addr %s2743, 8
        %s2745 = scalar_lea.vmem %s4, %s2744
      $region48: #{tpu_custom_call.1} parent=43 // pred_fallthru
        _
    $region44: #{tpu_custom_call.1} parent=5 // pred_fallthru
      _
  $region6: #{tpu_custom_call.1} parent=0 // loop_footer
    %s14 = sadd.s32 1, %s10
  $region7: #{tpu_custom_call.1} parent=0 // loop_footer_branch
    %9 = sbr.rel target = $region3
  $region8: #{tpu_custom_call.1} parent=0 // loop_exit
    _

</llo_original>
